<compile_context>
chip_gen: v7x
topology: tpu7x:2x2x1
jax: 0.10.0
libtpu: 0.0.40
codegen_flags: <defaults>
</compile_context>

<pallas_src>
import functools

import jax
import jax.numpy as jnp
from jax.experimental import pallas as pl
from jax.experimental.pallas import tpu as pltpu


# ----------------------------------------------------------------------------
# helpers
# ----------------------------------------------------------------------------
def _round_up(x, m):
    return (x + m - 1) // m * m


def _pad_axis(a, axis, size, val=0.0):
    pad = size - a.shape[axis]
    if pad <= 0:
        return a
    widths = [(0, 0)] * a.ndim
    widths[axis] = (0, pad)
    return jnp.pad(a, widths, constant_values=val)


# ----------------------------------------------------------------------------
# Fused kernel: patch prologue -> ConvMixer block b -> unpatch epilogue.
# grid = (batch, blocks); the activation lives in VMEM scratch across blocks.
# ----------------------------------------------------------------------------
def _denoiser_kernel(xk_ref, wks_ref, bpos_ref, sp_ref, tp_ref,
                     dww_ref, dwb_ref, s1_ref, t1_ref,
                     pww_ref, pwb_ref, s2_ref, t2_ref,
                     wun_ref, bun_ref, sun_ref, tun_ref,
                     o_ref, xpad_ref, yflat_ref,
                     *, nh, nw, k, pd, co):
    b = pl.program_id(1)
    nb = pl.num_programs(1)

    def scatter_interior():
        # flat (nh*nw, Dp) activation -> sublane-aligned interior of the
        # padded 3-D scratch, one row at a time (no value reshape/relayout).
        for i in range(nh):
            xpad_ref[pd + i, co:co + nw, :] = yflat_ref[i * nw:(i + 1) * nw, :]

    # ---- b == 0: zero the halo and run the patch-embed prologue ------------
    @pl.when(b == 0)
    def _patch():
        xpad_ref[...] = jnp.zeros_like(xpad_ref)
        y0 = jnp.dot(xk_ref[0], wks_ref[...],
                     preferred_element_type=jnp.float32)          # (nh*nw, Dp)
        y0 = jnp.maximum(y0 + bpos_ref[...], 0.0)                 # bias + ReLU
        yflat_ref[...] = y0 * sp_ref[...] + tp_ref[...]           # folded BN
        scatter_interior()

    # ---- depthwise conv: taps sliced straight off the resident padded ref --
    # TODO(synk): on v6e/v7x the tap FMAs could run in bf16 (~2x VALU); kept
    #   in f32 so the same kernel is numerically safe on v5e (no bf16 VPU).
    dww = dww_ref[b]                                              # (k*k, Dp)
    acc = None
    for dy in range(k):
        for dx in range(k):
            tap = xpad_ref[dy:dy + nh,
                           co - pd + dx:co - pd + dx + nw, :] * dww[dy * k + dx]
            acc = tap if acc is None else acc + tap
    y = jnp.maximum(acc + dwb_ref[b], 0.0)                        # ReLU
    y = y * s1_ref[b] + t1_ref[b]                                 # folded BN1
    y = y + xpad_ref[pd:pd + nh, co:co + nw, :]                   # residual
    for i in range(nh):                                           # flatten rows
        yflat_ref[i * nw:(i + 1) * nw, :] = y[i]

    # ---- pointwise 1x1 conv on the MXU (bf16 operands, f32 accumulation) ---
    y2 = jnp.dot(yflat_ref[...].astype(jnp.bfloat16), pww_ref[b],
                 preferred_element_type=jnp.float32)
    y2 = jnp.maximum(y2 + pwb_ref[b], 0.0)                        # ReLU
    y2 = y2 * s2_ref[b] + t2_ref[b]                               # folded BN2

    # ---- keep the activation resident for the next block -------------------
    @pl.when(b < nb - 1)
    def _stash():
        yflat_ref[...] = y2
        scatter_interior()

    # ---- b == B-1: unpatch epilogue (exact Fo lanes, no padded store) ------
    @pl.when(b == nb - 1)
    def _unpatch():
        o = jnp.dot(y2.astype(jnp.bfloat16), wun_ref[...],
                    preferred_element_type=jnp.float32)           # (nh*nw, Fo)
        o = jnp.maximum(o + bun_ref[...], 0.0)
        o_ref[0] = o * sun_ref[...] + tun_ref[...]


def _run_denoiser(xk, w_ks, bias_pos, s_p, t_p,
                  dww, dwb, s1, t1, pww, pwb, s2, t2,
                  w_un, b_un, s_un, t_un, *, nh, nw, k, Dp, Fo):
    N, M, Kk = xk.shape
    B = dww.shape[0]
    pd = (k - 1) // 2
    co = _round_up(pd, 8)                      # sublane-aligned interior start
    CW = _round_up(co + nw + pd, 8)            # padded scratch column extent
    RH = nh + 2 * pd

    def full(arr):                             # whole-array, VMEM-resident
        nd = arr.ndim
        return pl.BlockSpec(arr.shape, lambda n, b, _nd=nd: (0,) * _nd)

    kernel = functools.partial(_denoiser_kernel,
                               nh=nh, nw=nw, k=k, pd=pd, co=co)
    return pl.pallas_call(
        kernel,
        out_shape=jax.ShapeDtypeStruct((N, M, Fo), jnp.float32),
        grid_spec=pltpu.PrefetchScalarGridSpec(
            num_scalar_prefetch=0,
            grid=(N, B),
            in_specs=[
                pl.BlockSpec((1, M, Kk), lambda n, b: (n, 0, 0)),
                full(w_ks), full(bias_pos), full(s_p), full(t_p),
                full(dww), full(dwb), full(s1), full(t1),
                full(pww), full(pwb), full(s2), full(t2),
                full(w_un), full(b_un), full(s_un), full(t_un),
            ],
            out_specs=pl.BlockSpec((1, M, Fo), lambda n, b: (n, 0, 0)),
            scratch_shapes=[
                pltpu.VMEM((RH, CW, Dp), jnp.float32),   # padded resident act
                pltpu.VMEM((M, Dp), jnp.float32),        # flat matmul operand
            ],
        ),
        compiler_params=pltpu.CompilerParams(
            dimension_semantics=("parallel", "arbitrary")),
    )(xk, w_ks, bias_pos, s_p, t_p, dww, dwb, s1, t1,
      pww, pwb, s2, t2, w_un, b_un, s_un, t_un)


# ----------------------------------------------------------------------------
# Parameters (deterministic synthetic init mirroring the module's shapes;
# BN uses non-trivial inference-mode running stats so the BN fold is tested).
# ----------------------------------------------------------------------------
def init_params(key, *, patch_size, conv_dims, pos_embed_dim, conv_blocks,
                conv_kernel_size, H, W):
    eps = 1e-5
    keys = iter(jax.random.split(key, 64 + 16 * conv_blocks))

    def nrm(shape, sc):
        return sc * jax.random.normal(next(keys), shape, jnp.float32)

    def bn(c):
        gamma = 1.0 + 0.2 * jax.random.normal(next(keys), (c,), jnp.float32)
        beta = 0.2 * jax.random.normal(next(keys), (c,), jnp.float32)
        mean = 0.2 * jax.random.normal(next(keys), (c,), jnp.float32)
        var = 1.0 + 0.5 * jax.random.uniform(next(keys), (c,), jnp.float32)
        s = gamma / jnp.sqrt(var + eps)
        t = beta - mean * s
        return s, t

    cin = 2 + pos_embed_dim + 1
    p = {}
    p['emb_H'] = nrm((H, pos_embed_dim), 1.0)
    p['emb_W'] = nrm((W, pos_embed_dim), 1.0)
    p['patch_w'] = nrm((conv_dims, cin, patch_size, patch_size), 0.1)
    p['patch_b'] = nrm((conv_dims,), 0.1)
    p['patch_bn_s'], p['patch_bn_t'] = bn(conv_dims)
    blocks = []
    for _ in range(conv_blocks):
        blk = {}
        blk['dw_w'] = nrm((conv_dims, 1, conv_kernel_size, conv_kernel_size), 0.2)
        blk['dw_b'] = nrm((conv_dims,), 0.1)
        blk['bn1_s'], blk['bn1_t'] = bn(conv_dims)
        blk['pw_w'] = nrm((conv_dims, conv_dims, 1, 1), 0.2)
        blk['pw_b'] = nrm((conv_dims,), 0.1)
        blk['bn2_s'], blk['bn2_t'] = bn(conv_dims)
        blocks.append(blk)
    p['blocks'] = blocks
    p['unpatch_w'] = nrm((conv_dims, 2, patch_size, patch_size), 0.1)
    p['unpatch_b'] = nrm((2,), 0.1)
    p['unpatch_bn_s'], p['unpatch_bn_t'] = bn(2)
    return p


# ----------------------------------------------------------------------------
# Pallas forward pass
# ----------------------------------------------------------------------------
def forward(params, masked_kspace, mask, *, patch_size, conv_kernel_size):
    N, _, H, W = masked_kspace.shape
    ps, k = patch_size, conv_kernel_size
    D = params['patch_w'].shape[0]
    P = params['emb_H'].shape[1]
    nh, nw = H // ps, W // ps
    Dp = _round_up(D, 128)                    # lane-dense channel padding
    Fo = 2 * ps * ps
    f32 = jnp.float32
    blocks = params['blocks']
    assert len(blocks) >= 1, "fused kernel assumes conv_blocks >= 1"
    assert k % 2 == 1, "padding='same' assumes an odd depthwise kernel"

    # -- fold position-embedding + mask channels into a per-position bias ----
    # (batch-independent; assumes the sampling mask is shared across the
    #  batch, shape (1,1,W,1) as in the reference usage)
    pe = params['emb_H'][:, None, :] + params['emb_W'][None, :, :]       # (H,W,P)
    m_img = jnp.broadcast_to(mask.reshape(1, W, 1).astype(f32), (H, W, 1))
    pm = jnp.concatenate([pe, m_img], axis=-1)                           # (H,W,P+1)
    pm_p = pm.reshape(nh, ps, nw, ps, P + 1).transpose(0, 2, 1, 3, 4)
    pm_p = pm_p.reshape(nh * nw, ps * ps * (P + 1))
    w_pm = jnp.transpose(params['patch_w'][:, 2:], (2, 3, 1, 0))
    w_pm = w_pm.reshape(ps * ps * (P + 1), D)
    bias_pos = _pad_axis(pm_p @ w_pm + params['patch_b'][None, :], 1, Dp)

    # -- k-space patches (channels-last, only the 2 real channels, bf16) -----
    xk = masked_kspace.astype(f32).transpose(0, 2, 3, 1)
    xk = xk.reshape(N, nh, ps, nw, ps, 2).transpose(0, 1, 3, 2, 4, 5)
    xk = xk.reshape(N, nh * nw, ps * ps * 2).astype(jnp.bfloat16)
    w_ks = jnp.transpose(params['patch_w'][:, :2], (2, 3, 1, 0)).reshape(ps * ps * 2, D)
    w_ks = _pad_axis(w_ks, 1, Dp).astype(jnp.bfloat16)
    s_p = _pad_axis(params['patch_bn_s'][None, :], 1, Dp, 1.0)
    t_p = _pad_axis(params['patch_bn_t'][None, :], 1, Dp)

    # -- per-block ConvMixer weights, stacked on a leading block axis --------
    dww = jnp.stack([_pad_axis(
        jnp.transpose(b_['dw_w'][:, 0], (1, 2, 0)).reshape(k * k, D), 1, Dp)
        for b_ in blocks])
    dwb = jnp.stack([_pad_axis(b_['dw_b'][None, :], 1, Dp) for b_ in blocks])
    s1 = jnp.stack([_pad_axis(b_['bn1_s'][None, :], 1, Dp, 1.0) for b_ in blocks])
    t1 = jnp.stack([_pad_axis(b_['bn1_t'][None, :], 1, Dp) for b_ in blocks])
    pww = jnp.stack([_pad_axis(_pad_axis(b_['pw_w'][:, :, 0, 0].T, 0, Dp), 1, Dp)
                     for b_ in blocks]).astype(jnp.bfloat16)
    pwb = jnp.stack([_pad_axis(b_['pw_b'][None, :], 1, Dp) for b_ in blocks])
    s2 = jnp.stack([_pad_axis(b_['bn2_s'][None, :], 1, Dp, 1.0) for b_ in blocks])
    t2 = jnp.stack([_pad_axis(b_['bn2_t'][None, :], 1, Dp) for b_ in blocks])

    # -- unpatch (ConvTranspose2d k=stride=ps), exact Fo output lanes --------
    w_un = _pad_axis(params['unpatch_w'].reshape(D, Fo), 0, Dp).astype(jnp.bfloat16)
    b_un = jnp.repeat(params['unpatch_b'], ps * ps)[None, :]
    s_un = jnp.repeat(params['unpatch_bn_s'], ps * ps)[None, :]
    t_un = jnp.repeat(params['unpatch_bn_t'], ps * ps)[None, :]

    out = _run_denoiser(xk, w_ks, bias_pos, s_p, t_p,
                        dww, dwb, s1, t1, pww, pwb, s2, t2,
                        w_un, b_un, s_un, t_un,
                        nh=nh, nw=nw, k=k, Dp=Dp, Fo=Fo)        # (N, nh*nw, Fo)

    out = out.reshape(N, nh, nw, 2, ps, ps).transpose(0, 3, 1, 4, 2, 5)
    return out.reshape(N, 2, H, W)


# ----------------------------------------------------------------------------
# Pure-JAX reference (faithful to the PyTorch module, all f32)
# ----------------------------------------------------------------------------
def forward_ref(params, masked_kspace, mask, *, patch_size, conv_kernel_size):
    N, _, H, W = masked_kspace.shape
    ps, k = patch_size, conv_kernel_size
    D = params['patch_w'].shape[0]
    P = params['emb_H'].shape[1]
    nh, nw = H // ps, W // ps

    pe = params['emb_H'][:, None, :] + params['emb_W'][None, :, :]
    pe = jnp.broadcast_to(jnp.transpose(pe, (2, 0, 1))[None], (N, P, H, W))
    m = jnp.broadcast_to(jnp.transpose(mask, (0, 3, 1, 2)), (N, 1, H, W))
    pre = jnp.concatenate([masked_kspace.astype(jnp.float32), pe,
                           m.astype(jnp.float32)], axis=1)
    Cin = pre.shape[1]

    xp = pre.reshape(N, Cin, nh, ps, nw, ps).transpose(0, 2, 4, 1, 3, 5)
    xp = xp.reshape(N * nh * nw, Cin * ps * ps)
    wp = params['patch_w'].reshape(D, Cin * ps * ps).T
    y = jnp.maximum(xp @ wp + params['patch_b'][None], 0.0)
    y = y * params['patch_bn_s'][None] + params['patch_bn_t'][None]
    y = y.reshape(N, nh, nw, D)

    pd = (k - 1) // 2
    for blk in params['blocks']:
        xpad = jnp.pad(y, ((0, 0), (pd, pd), (pd, pd), (0, 0)))
        dww = jnp.transpose(blk['dw_w'][:, 0], (1, 2, 0)).reshape(k * k, D)
        acc = jnp.zeros_like(y)
        for dy in range(k):
            for dx in range(k):
                acc = acc + xpad[:, dy:dy + nh, dx:dx + nw, :] * dww[dy * k + dx]
        z = jnp.maximum(acc + blk['dw_b'], 0.0) * blk['bn1_s'] + blk['bn1_t'] + y
        z2 = jnp.maximum(z.reshape(-1, D) @ blk['pw_w'][:, :, 0, 0].T + blk['pw_b'], 0.0)
        z2 = z2 * blk['bn2_s'] + blk['bn2_t']
        y = z2.reshape(N, nh, nw, D)

    w_un = params['unpatch_w'].reshape(D, 2 * ps * ps)
    b_un = jnp.repeat(params['unpatch_b'], ps * ps)[None]
    s_un = jnp.repeat(params['unpatch_bn_s'], ps * ps)[None]
    t_un = jnp.repeat(params['unpatch_bn_t'], ps * ps)[None]
    o = jnp.maximum(y.reshape(-1, D) @ w_un + b_un, 0.0) * s_un + t_un
    o = o.reshape(N, nh, nw, 2, ps, ps).transpose(0, 3, 1, 4, 2, 5).reshape(N, 2, H, W)
    return o


# ----------------------------------------------------------------------------
# Demo
# ----------------------------------------------------------------------------
if __name__ == "__main__":
    N, H, W = 2, 16, 16
    patch_size, conv_dims, pos_embed_dim = 4, 16, 4
    conv_blocks, conv_kernel_size = 2, 3

    key = jax.random.PRNGKey(0)
    kp, kx, km = jax.random.split(key, 3)
    params = init_params(kp, patch_size=patch_size, conv_dims=conv_dims,
                         pos_embed_dim=pos_embed_dim, conv_blocks=conv_blocks,
                         conv_kernel_size=conv_kernel_size, H=H, W=W)

    masked_kspace = jax.random.normal(kx, (N, 2, H, W), jnp.float32)
    mask = (jax.random.uniform(km, (1, 1, W, 1)) > 0.5).astype(jnp.float32)

    fwd = jax.jit(functools.partial(forward, patch_size=patch_size,
                                    conv_kernel_size=conv_kernel_size))
    out = jax.block_until_ready(fwd(params, masked_kspace, mask))

    ref = jax.block_until_ready(
        forward_ref(params, masked_kspace, mask, patch_size=patch_size,
                    conv_kernel_size=conv_kernel_size))

    assert out.shape == (N, 2, H, W), out.shape
    assert bool(jnp.all(jnp.isfinite(out)))
    max_err = float(jnp.max(jnp.abs(out - ref)))
    assert bool(jnp.allclose(out, ref, atol=2e-2, rtol=2e-2)), max_err
    print("KERNEL_OK")
</pallas_src>

<mosaic_0001>
module attributes {stable_mosaic.version = 11 : i64} {
  func.func @_denoiser_kernel(%arg0: i32, %arg1: i32, %arg2: memref<1x16x32xbf16, #tpu.memory_space<vmem>>, %arg3: memref<32x128xbf16, #tpu.memory_space<vmem>>, %arg4: memref<16x128xf32, #tpu.memory_space<vmem>>, %arg5: memref<1x128xf32, #tpu.memory_space<vmem>>, %arg6: memref<1x128xf32, #tpu.memory_space<vmem>>, %arg7: memref<2x9x128xf32, #tpu.memory_space<vmem>>, %arg8: memref<2x1x128xf32, #tpu.memory_space<vmem>>, %arg9: memref<2x1x128xf32, #tpu.memory_space<vmem>>, %arg10: memref<2x1x128xf32, #tpu.memory_space<vmem>>, %arg11: memref<2x128x128xbf16, #tpu.memory_space<vmem>>, %arg12: memref<2x1x128xf32, #tpu.memory_space<vmem>>, %arg13: memref<2x1x128xf32, #tpu.memory_space<vmem>>, %arg14: memref<2x1x128xf32, #tpu.memory_space<vmem>>, %arg15: memref<128x32xbf16, #tpu.memory_space<vmem>>, %arg16: memref<1x32xf32, #tpu.memory_space<vmem>>, %arg17: memref<1x32xf32, #tpu.memory_space<vmem>>, %arg18: memref<1x32xf32, #tpu.memory_space<vmem>>, %arg19: memref<1x16x32xf32, #tpu.memory_space<vmem>>, %arg20: memref<6x16x128xf32, #tpu.memory_space<vmem>>, %arg21: memref<16x128xf32, #tpu.memory_space<vmem>>) attributes {dimension_semantics = [#tpu.dimension_semantics<parallel>, #tpu.dimension_semantics<arbitrary>], iteration_bounds = array<i64: 2, 2>, scalar_prefetch = 0 : i64, scratch_operands = 2 : i64, tpu.core_type = #tpu.core_type<tc>, window_params = [{transform_indices = @transform_0, window_bounds = array<i64: 1, 16, 32>}, {pipeline_mode = #tpu.pipeline_mode<synchronous>, transform_indices = @transform_1, window_bounds = array<i64: 32, 128>}, {pipeline_mode = #tpu.pipeline_mode<synchronous>, transform_indices = @transform_2, window_bounds = array<i64: 16, 128>}, {pipeline_mode = #tpu.pipeline_mode<synchronous>, transform_indices = @transform_3, window_bounds = array<i64: 1, 128>}, {pipeline_mode = #tpu.pipeline_mode<synchronous>, transform_indices = @transform_4, window_bounds = array<i64: 1, 128>}, {pipeline_mode = #tpu.pipeline_mode<synchronous>, transform_indices = @transform_5, window_bounds = array<i64: 2, 9, 128>}, {pipeline_mode = #tpu.pipeline_mode<synchronous>, transform_indices = @transform_6, window_bounds = array<i64: 2, 1, 128>}, {pipeline_mode = #tpu.pipeline_mode<synchronous>, transform_indices = @transform_7, window_bounds = array<i64: 2, 1, 128>}, {pipeline_mode = #tpu.pipeline_mode<synchronous>, transform_indices = @transform_8, window_bounds = array<i64: 2, 1, 128>}, {pipeline_mode = #tpu.pipeline_mode<synchronous>, transform_indices = @transform_9, window_bounds = array<i64: 2, 128, 128>}, {pipeline_mode = #tpu.pipeline_mode<synchronous>, transform_indices = @transform_10, window_bounds = array<i64: 2, 1, 128>}, {pipeline_mode = #tpu.pipeline_mode<synchronous>, transform_indices = @transform_11, window_bounds = array<i64: 2, 1, 128>}, {pipeline_mode = #tpu.pipeline_mode<synchronous>, transform_indices = @transform_12, window_bounds = array<i64: 2, 1, 128>}, {pipeline_mode = #tpu.pipeline_mode<synchronous>, transform_indices = @transform_13, window_bounds = array<i64: 128, 32>}, {pipeline_mode = #tpu.pipeline_mode<synchronous>, transform_indices = @transform_14, window_bounds = array<i64: 1, 32>}, {pipeline_mode = #tpu.pipeline_mode<synchronous>, transform_indices = @transform_15, window_bounds = array<i64: 1, 32>}, {pipeline_mode = #tpu.pipeline_mode<synchronous>, transform_indices = @transform_16, window_bounds = array<i64: 1, 32>}, {transform_indices = @transform_17, window_bounds = array<i64: 1, 16, 32>}]} {
    %c0_i32 = arith.constant 0 : i32
    %0 = arith.cmpi eq, %arg1, %c0_i32 : i32
    %1 = arith.extui %0 : i1 to i32
    %c0_i32_0 = arith.constant 0 : i32
    %2 = arith.cmpi ne, %1, %c0_i32_0 : i32
    scf.if %2 {
      %cst_54 = arith.constant 0.000000e+00 : f32
      %131 = vector.broadcast %cst_54 : f32 to vector<6x16x128xf32>
      %c0_55 = arith.constant 0 : index
      %c0_56 = arith.constant 0 : index
      %c0_57 = arith.constant 0 : index
      %132 = vector.load %arg20[%c0_55, %c0_56, %c0_57] : memref<6x16x128xf32, #tpu.memory_space<vmem>>, vector<6x16x128xf32>
      tpu.vector_store %arg20[%c0_55, %c0_56, %c0_57], %131 {strides = array<i32>} : memref<6x16x128xf32, #tpu.memory_space<vmem>>, vector<6x16x128xf32>,
      %c0_58 = arith.constant 0 : index
      %c0_59 = arith.constant 0 : index
      %c0_60 = arith.constant 0 : index
      %133 = vector.load %arg2[%c0_58, %c0_59, %c0_60] : memref<1x16x32xbf16, #tpu.memory_space<vmem>>, vector<1x16x32xbf16>
      %134 = vector.shape_cast %133 : vector<1x16x32xbf16> to vector<16x32xbf16>
      %c0_61 = arith.constant 0 : index
      %c0_62 = arith.constant 0 : index
      %135 = vector.load %arg3[%c0_61, %c0_62] : memref<32x128xbf16, #tpu.memory_space<vmem>>, vector<32x128xbf16>
      %cst_63 = arith.constant dense<0.000000e+00> : vector<16x128xf32>
      %136 = tpu.matmul %134, %135, %cst_63 {dimension_numbers = #tpu.dot_dimension_numbers<[1], [0], [0], [1], [0, 0, 1, 1], [], []>} : vector<16x32xbf16>, vector<32x128xbf16>, vector<16x128xf32> -> vector<16x128xf32>
      %c0_64 = arith.constant 0 : index
      %c0_65 = arith.constant 0 : index
      %137 = vector.load %arg4[%c0_64, %c0_65] : memref<16x128xf32, #tpu.memory_space<vmem>>, vector<16x128xf32>
      %138 = arith.addf %136, %137 : vector<16x128xf32>
      %cst_66 = arith.constant 0.000000e+00 : f32
      %139 = vector.broadcast %cst_66 : f32 to vector<16x128xf32>
      %140 = arith.maximumf %138, %139 : vector<16x128xf32>
      %c0_67 = arith.constant 0 : index
      %c0_68 = arith.constant 0 : index
      %141 = vector.load %arg5[%c0_67, %c0_68] : memref<1x128xf32, #tpu.memory_space<vmem>>, vector<1x128xf32>
      %142 = vector.broadcast %141 : vector<1x128xf32> to vector<16x128xf32>
      %143 = arith.mulf %140, %142 : vector<16x128xf32>
      %c0_69 = arith.constant 0 : index
      %c0_70 = arith.constant 0 : index
      %144 = vector.load %arg6[%c0_69, %c0_70] : memref<1x128xf32, #tpu.memory_space<vmem>>, vector<1x128xf32>
      %145 = vector.broadcast %144 : vector<1x128xf32> to vector<16x128xf32>
      %146 = arith.addf %143, %145 : vector<16x128xf32>
      %c0_71 = arith.constant 0 : index
      %c0_72 = arith.constant 0 : index
      %147 = vector.load %arg21[%c0_71, %c0_72] : memref<16x128xf32, #tpu.memory_space<vmem>>, vector<16x128xf32>
      tpu.vector_store %arg21[%c0_71, %c0_72], %146 {strides = array<i32>} : memref<16x128xf32, #tpu.memory_space<vmem>>, vector<16x128xf32>,
      %c0_73 = arith.constant 0 : index
      %c0_74 = arith.constant 0 : index
      %148 = vector.load %arg21[%c0_73, %c0_74] : memref<16x128xf32, #tpu.memory_space<vmem>>, vector<4x128xf32>
      %c1_75 = arith.constant 1 : index
      %c8_76 = arith.constant 8 : index
      %c0_77 = arith.constant 0 : index
      %149 = vector.load %arg20[%c1_75, %c8_76, %c0_77] : memref<6x16x128xf32, #tpu.memory_space<vmem>>, vector<1x4x128xf32>
      %150 = vector.shape_cast %149 : vector<1x4x128xf32> to vector<4x128xf32>
      %151 = vector.shape_cast %148 : vector<4x128xf32> to vector<1x4x128xf32>
      tpu.vector_store %arg20[%c1_75, %c8_76, %c0_77], %151 {strides = array<i32>} : memref<6x16x128xf32, #tpu.memory_space<vmem>>, vector<1x4x128xf32>,
      %c4_78 = arith.constant 4 : index
      %c0_79 = arith.constant 0 : index
      %152 = vector.load %arg21[%c4_78, %c0_79] : memref<16x128xf32, #tpu.memory_space<vmem>>, vector<4x128xf32>
      %c2_80 = arith.constant 2 : index
      %c8_81 = arith.constant 8 : index
      %c0_82 = arith.constant 0 : index
      %153 = vector.load %arg20[%c2_80, %c8_81, %c0_82] : memref<6x16x128xf32, #tpu.memory_space<vmem>>, vector<1x4x128xf32>
      %154 = vector.shape_cast %153 : vector<1x4x128xf32> to vector<4x128xf32>
      %155 = vector.shape_cast %152 : vector<4x128xf32> to vector<1x4x128xf32>
      tpu.vector_store %arg20[%c2_80, %c8_81, %c0_82], %155 {strides = array<i32>} : memref<6x16x128xf32, #tpu.memory_space<vmem>>, vector<1x4x128xf32>,
      %c8_83 = arith.constant 8 : index
      %c0_84 = arith.constant 0 : index
      %156 = vector.load %arg21[%c8_83, %c0_84] : memref<16x128xf32, #tpu.memory_space<vmem>>, vector<4x128xf32>
      %c3 = arith.constant 3 : index
      %c8_85 = arith.constant 8 : index
      %c0_86 = arith.constant 0 : index
      %157 = vector.load %arg20[%c3, %c8_85, %c0_86] : memref<6x16x128xf32, #tpu.memory_space<vmem>>, vector<1x4x128xf32>
      %158 = vector.shape_cast %157 : vector<1x4x128xf32> to vector<4x128xf32>
      %159 = vector.shape_cast %156 : vector<4x128xf32> to vector<1x4x128xf32>
      tpu.vector_store %arg20[%c3, %c8_85, %c0_86], %159 {strides = array<i32>} : memref<6x16x128xf32, #tpu.memory_space<vmem>>, vector<1x4x128xf32>,
      %c12_87 = arith.constant 12 : index
      %c0_88 = arith.constant 0 : index
      %160 = vector.load %arg21[%c12_87, %c0_88] : memref<16x128xf32, #tpu.memory_space<vmem>>, vector<4x128xf32>
      %c4_89 = arith.constant 4 : index
      %c8_90 = arith.constant 8 : index
      %c0_91 = arith.constant 0 : index
      %161 = vector.load %arg20[%c4_89, %c8_90, %c0_91] : memref<6x16x128xf32, #tpu.memory_space<vmem>>, vector<1x4x128xf32>
      %162 = vector.shape_cast %161 : vector<1x4x128xf32> to vector<4x128xf32>
      %163 = vector.shape_cast %160 : vector<4x128xf32> to vector<1x4x128xf32>
      tpu.vector_store %arg20[%c4_89, %c8_90, %c0_91], %163 {strides = array<i32>} : memref<6x16x128xf32, #tpu.memory_space<vmem>>, vector<1x4x128xf32>,
    } else {
    }
    %3 = arith.index_cast %arg1 : i32 to index
    %c0 = arith.constant 0 : index
    %c0_1 = arith.constant 0 : index
    %4 = vector.load %arg7[%3, %c0, %c0_1] : memref<2x9x128xf32, #tpu.memory_space<vmem>>, vector<1x9x128xf32>
    %5 = vector.shape_cast %4 : vector<1x9x128xf32> to vector<9x128xf32>
    %c0_2 = arith.constant 0 : index
    %c7 = arith.constant 7 : index
    %c0_3 = arith.constant 0 : index
    %6 = vector.load %arg20[%c0_2, %c7, %c0_3] : memref<6x16x128xf32, #tpu.memory_space<vmem>>, vector<4x4x128xf32>
    %7 = vector.extract_strided_slice %5 {offsets = [0, 0], sizes = [1, 128], strides = [1, 1]} : vector<9x128xf32> to vector<1x128xf32>
    %8 = vector.shape_cast %7 : vector<1x128xf32> to vector<128xf32>
    %9 = vector.shape_cast %8 : vector<128xf32> to vector<1x1x128xf32>
    %10 = vector.broadcast %9 : vector<1x1x128xf32> to vector<4x4x128xf32>
    %11 = arith.mulf %6, %10 : vector<4x4x128xf32>
    %c0_4 = arith.constant 0 : index
    %c8 = arith.constant 8 : index
    %c0_5 = arith.constant 0 : index
    %12 = vector.load %arg20[%c0_4, %c8, %c0_5] : memref<6x16x128xf32, #tpu.memory_space<vmem>>, vector<4x4x128xf32>
    %13 = vector.extract_strided_slice %5 {offsets = [1, 0], sizes = [1, 128], strides = [1, 1]} : vector<9x128xf32> to vector<1x128xf32>
    %14 = vector.shape_cast %13 : vector<1x128xf32> to vector<128xf32>
    %15 = vector.shape_cast %14 : vector<128xf32> to vector<1x1x128xf32>
    %16 = vector.broadcast %15 : vector<1x1x128xf32> to vector<4x4x128xf32>
    %17 = arith.mulf %12, %16 : vector<4x4x128xf32>
    %18 = arith.addf %11, %17 : vector<4x4x128xf32>
    %c0_6 = arith.constant 0 : index
    %c9 = arith.constant 9 : index
    %c0_7 = arith.constant 0 : index
    %19 = vector.load %arg20[%c0_6, %c9, %c0_7] : memref<6x16x128xf32, #tpu.memory_space<vmem>>, vector<4x4x128xf32>
    %20 = vector.extract_strided_slice %5 {offsets = [2, 0], sizes = [1, 128], strides = [1, 1]} : vector<9x128xf32> to vector<1x128xf32>
    %21 = vector.shape_cast %20 : vector<1x128xf32> to vector<128xf32>
    %22 = vector.shape_cast %21 : vector<128xf32> to vector<1x1x128xf32>
    %23 = vector.broadcast %22 : vector<1x1x128xf32> to vector<4x4x128xf32>
    %24 = arith.mulf %19, %23 : vector<4x4x128xf32>
    %25 = arith.addf %18, %24 : vector<4x4x128xf32>
    %c1 = arith.constant 1 : index
    %c7_8 = arith.constant 7 : index
    %c0_9 = arith.constant 0 : index
    %26 = vector.load %arg20[%c1, %c7_8, %c0_9] : memref<6x16x128xf32, #tpu.memory_space<vmem>>, vector<4x4x128xf32>
    %27 = vector.extract_strided_slice %5 {offsets = [3, 0], sizes = [1, 128], strides = [1, 1]} : vector<9x128xf32> to vector<1x128xf32>
    %28 = vector.shape_cast %27 : vector<1x128xf32> to vector<128xf32>
    %29 = vector.shape_cast %28 : vector<128xf32> to vector<1x1x128xf32>
    %30 = vector.broadcast %29 : vector<1x1x128xf32> to vector<4x4x128xf32>
    %31 = arith.mulf %26, %30 : vector<4x4x128xf32>
    %32 = arith.addf %25, %31 : vector<4x4x128xf32>
    %c1_10 = arith.constant 1 : index
    %c8_11 = arith.constant 8 : index
    %c0_12 = arith.constant 0 : index
    %33 = vector.load %arg20[%c1_10, %c8_11, %c0_12] : memref<6x16x128xf32, #tpu.memory_space<vmem>>, vector<4x4x128xf32>
    %34 = vector.extract_strided_slice %5 {offsets = [4, 0], sizes = [1, 128], strides = [1, 1]} : vector<9x128xf32> to vector<1x128xf32>
    %35 = vector.shape_cast %34 : vector<1x128xf32> to vector<128xf32>
    %36 = vector.shape_cast %35 : vector<128xf32> to vector<1x1x128xf32>
    %37 = vector.broadcast %36 : vector<1x1x128xf32> to vector<4x4x128xf32>
    %38 = arith.mulf %33, %37 : vector<4x4x128xf32>
    %39 = arith.addf %32, %38 : vector<4x4x128xf32>
    %c1_13 = arith.constant 1 : index
    %c9_14 = arith.constant 9 : index
    %c0_15 = arith.constant 0 : index
    %40 = vector.load %arg20[%c1_13, %c9_14, %c0_15] : memref<6x16x128xf32, #tpu.memory_space<vmem>>, vector<4x4x128xf32>
    %41 = vector.extract_strided_slice %5 {offsets = [5, 0], sizes = [1, 128], strides = [1, 1]} : vector<9x128xf32> to vector<1x128xf32>
    %42 = vector.shape_cast %41 : vector<1x128xf32> to vector<128xf32>
    %43 = vector.shape_cast %42 : vector<128xf32> to vector<1x1x128xf32>
    %44 = vector.broadcast %43 : vector<1x1x128xf32> to vector<4x4x128xf32>
    %45 = arith.mulf %40, %44 : vector<4x4x128xf32>
    %46 = arith.addf %39, %45 : vector<4x4x128xf32>
    %c2 = arith.constant 2 : index
    %c7_16 = arith.constant 7 : index
    %c0_17 = arith.constant 0 : index
    %47 = vector.load %arg20[%c2, %c7_16, %c0_17] : memref<6x16x128xf32, #tpu.memory_space<vmem>>, vector<4x4x128xf32>
    %48 = vector.extract_strided_slice %5 {offsets = [6, 0], sizes = [1, 128], strides = [1, 1]} : vector<9x128xf32> to vector<1x128xf32>
    %49 = vector.shape_cast %48 : vector<1x128xf32> to vector<128xf32>
    %50 = vector.shape_cast %49 : vector<128xf32> to vector<1x1x128xf32>
    %51 = vector.broadcast %50 : vector<1x1x128xf32> to vector<4x4x128xf32>
    %52 = arith.mulf %47, %51 : vector<4x4x128xf32>
    %53 = arith.addf %46, %52 : vector<4x4x128xf32>
    %c2_18 = arith.constant 2 : index
    %c8_19 = arith.constant 8 : index
    %c0_20 = arith.constant 0 : index
    %54 = vector.load %arg20[%c2_18, %c8_19, %c0_20] : memref<6x16x128xf32, #tpu.memory_space<vmem>>, vector<4x4x128xf32>
    %55 = vector.extract_strided_slice %5 {offsets = [7, 0], sizes = [1, 128], strides = [1, 1]} : vector<9x128xf32> to vector<1x128xf32>
    %56 = vector.shape_cast %55 : vector<1x128xf32> to vector<128xf32>
    %57 = vector.shape_cast %56 : vector<128xf32> to vector<1x1x128xf32>
    %58 = vector.broadcast %57 : vector<1x1x128xf32> to vector<4x4x128xf32>
    %59 = arith.mulf %54, %58 : vector<4x4x128xf32>
    %60 = arith.addf %53, %59 : vector<4x4x128xf32>
    %c2_21 = arith.constant 2 : index
    %c9_22 = arith.constant 9 : index
    %c0_23 = arith.constant 0 : index
    %61 = vector.load %arg20[%c2_21, %c9_22, %c0_23] : memref<6x16x128xf32, #tpu.memory_space<vmem>>, vector<4x4x128xf32>
    %62 = vector.extract_strided_slice %5 {offsets = [8, 0], sizes = [1, 128], strides = [1, 1]} : vector<9x128xf32> to vector<1x128xf32>
    %63 = vector.shape_cast %62 : vector<1x128xf32> to vector<128xf32>
    %64 = vector.shape_cast %63 : vector<128xf32> to vector<1x1x128xf32>
    %65 = vector.broadcast %64 : vector<1x1x128xf32> to vector<4x4x128xf32>
    %66 = arith.mulf %61, %65 : vector<4x4x128xf32>
    %67 = arith.addf %60, %66 : vector<4x4x128xf32>
    %68 = arith.index_cast %arg1 : i32 to index
    %c0_24 = arith.constant 0 : index
    %c0_25 = arith.constant 0 : index
    %69 = vector.load %arg8[%68, %c0_24, %c0_25] : memref<2x1x128xf32, #tpu.memory_space<vmem>>, vector<1x1x128xf32>
    %70 = vector.shape_cast %69 : vector<1x1x128xf32> to vector<1x128xf32>
    %71 = vector.shape_cast %70 : vector<1x128xf32> to vector<1x1x128xf32>
    %72 = vector.broadcast %71 : vector<1x1x128xf32> to vector<4x4x128xf32>
    %73 = arith.addf %67, %72 : vector<4x4x128xf32>
    %cst = arith.constant 0.000000e+00 : f32
    %74 = vector.broadcast %cst : f32 to vector<4x4x128xf32>
    %75 = arith.maximumf %73, %74 : vector<4x4x128xf32>
    %76 = arith.index_cast %arg1 : i32 to index
    %c0_26 = arith.constant 0 : index
    %c0_27 = arith.constant 0 : index
    %77 = vector.load %arg9[%76, %c0_26, %c0_27] : memref<2x1x128xf32, #tpu.memory_space<vmem>>, vector<1x1x128xf32>
    %78 = vector.shape_cast %77 : vector<1x1x128xf32> to vector<1x128xf32>
    %79 = vector.shape_cast %78 : vector<1x128xf32> to vector<1x1x128xf32>
    %80 = vector.broadcast %79 : vector<1x1x128xf32> to vector<4x4x128xf32>
    %81 = arith.mulf %75, %80 : vector<4x4x128xf32>
    %82 = arith.index_cast %arg1 : i32 to index
    %c0_28 = arith.constant 0 : index
    %c0_29 = arith.constant 0 : index
    %83 = vector.load %arg10[%82, %c0_28, %c0_29] : memref<2x1x128xf32, #tpu.memory_space<vmem>>, vector<1x1x128xf32>
    %84 = vector.shape_cast %83 : vector<1x1x128xf32> to vector<1x128xf32>
    %85 = vector.shape_cast %84 : vector<1x128xf32> to vector<1x1x128xf32>
    %86 = vector.broadcast %85 : vector<1x1x128xf32> to vector<4x4x128xf32>
    %87 = arith.addf %81, %86 : vector<4x4x128xf32>
    %c1_30 = arith.constant 1 : index
    %c8_31 = arith.constant 8 : index
    %c0_32 = arith.constant 0 : index
    %88 = vector.load %arg20[%c1_30, %c8_31, %c0_32] : memref<6x16x128xf32, #tpu.memory_space<vmem>>, vector<4x4x128xf32>
    %89 = arith.addf %87, %88 : vector<4x4x128xf32>
    %90 = vector.extract_strided_slice %89 {offsets = [0, 0, 0], sizes = [1, 4, 128], strides = [1, 1, 1]} : vector<4x4x128xf32> to vector<1x4x128xf32>
    %91 = vector.shape_cast %90 : vector<1x4x128xf32> to vector<4x128xf32>
    %c0_33 = arith.constant 0 : index
    %c0_34 = arith.constant 0 : index
    %92 = vector.load %arg21[%c0_33, %c0_34] : memref<16x128xf32, #tpu.memory_space<vmem>>, vector<4x128xf32>
    tpu.vector_store %arg21[%c0_33, %c0_34], %91 {strides = array<i32>} : memref<16x128xf32, #tpu.memory_space<vmem>>, vector<4x128xf32>,
    %93 = vector.extract_strided_slice %89 {offsets = [1, 0, 0], sizes = [1, 4, 128], strides = [1, 1, 1]} : vector<4x4x128xf32> to vector<1x4x128xf32>
    %94 = vector.shape_cast %93 : vector<1x4x128xf32> to vector<4x128xf32>
    %c4 = arith.constant 4 : index
    %c0_35 = arith.constant 0 : index
    %95 = vector.load %arg21[%c4, %c0_35] : memref<16x128xf32, #tpu.memory_space<vmem>>, vector<4x128xf32>
    tpu.vector_store %arg21[%c4, %c0_35], %94 {strides = array<i32>} : memref<16x128xf32, #tpu.memory_space<vmem>>, vector<4x128xf32>,
    %96 = vector.extract_strided_slice %89 {offsets = [2, 0, 0], sizes = [1, 4, 128], strides = [1, 1, 1]} : vector<4x4x128xf32> to vector<1x4x128xf32>
    %97 = vector.shape_cast %96 : vector<1x4x128xf32> to vector<4x128xf32>
    %c8_36 = arith.constant 8 : index
    %c0_37 = arith.constant 0 : index
    %98 = vector.load %arg21[%c8_36, %c0_37] : memref<16x128xf32, #tpu.memory_space<vmem>>, vector<4x128xf32>
    tpu.vector_store %arg21[%c8_36, %c0_37], %97 {strides = array<i32>} : memref<16x128xf32, #tpu.memory_space<vmem>>, vector<4x128xf32>,
    %99 = vector.extract_strided_slice %89 {offsets = [3, 0, 0], sizes = [1, 4, 128], strides = [1, 1, 1]} : vector<4x4x128xf32> to vector<1x4x128xf32>
    %100 = vector.shape_cast %99 : vector<1x4x128xf32> to vector<4x128xf32>
    %c12 = arith.constant 12 : index
    %c0_38 = arith.constant 0 : index
    %101 = vector.load %arg21[%c12, %c0_38] : memref<16x128xf32, #tpu.memory_space<vmem>>, vector<4x128xf32>
    tpu.vector_store %arg21[%c12, %c0_38], %100 {strides = array<i32>} : memref<16x128xf32, #tpu.memory_space<vmem>>, vector<4x128xf32>,
    %c0_39 = arith.constant 0 : index
    %c0_40 = arith.constant 0 : index
    %102 = vector.load %arg21[%c0_39, %c0_40] : memref<16x128xf32, #tpu.memory_space<vmem>>, vector<16x128xf32>
    %103 = arith.truncf %102 : vector<16x128xf32> to vector<16x128xbf16>
    %104 = arith.index_cast %arg1 : i32 to index
    %c0_41 = arith.constant 0 : index
    %c0_42 = arith.constant 0 : index
    %105 = vector.load %arg11[%104, %c0_41, %c0_42] : memref<2x128x128xbf16, #tpu.memory_space<vmem>>, vector<1x128x128xbf16>
    %106 = vector.shape_cast %105 : vector<1x128x128xbf16> to vector<128x128xbf16>
    %cst_43 = arith.constant dense<0.000000e+00> : vector<16x128xf32>
    %107 = tpu.matmul %103, %106, %cst_43 {dimension_numbers = #tpu.dot_dimension_numbers<[1], [0], [0], [1], [0, 0, 1, 1], [], []>} : vector<16x128xbf16>, vector<128x128xbf16>, vector<16x128xf32> -> vector<16x128xf32>
    %108 = arith.index_cast %arg1 : i32 to index
    %c0_44 = arith.constant 0 : index
    %c0_45 = arith.constant 0 : index
    %109 = vector.load %arg12[%108, %c0_44, %c0_45] : memref<2x1x128xf32, #tpu.memory_space<vmem>>, vector<1x1x128xf32>
    %110 = vector.shape_cast %109 : vector<1x1x128xf32> to vector<1x128xf32>
    %111 = vector.broadcast %110 : vector<1x128xf32> to vector<16x128xf32>
    %112 = arith.addf %107, %111 : vector<16x128xf32>
    %cst_46 = arith.constant 0.000000e+00 : f32
    %113 = vector.broadcast %cst_46 : f32 to vector<16x128xf32>
    %114 = arith.maximumf %112, %113 : vector<16x128xf32>
    %115 = arith.index_cast %arg1 : i32 to index
    %c0_47 = arith.constant 0 : index
    %c0_48 = arith.constant 0 : index
    %116 = vector.load %arg13[%115, %c0_47, %c0_48] : memref<2x1x128xf32, #tpu.memory_space<vmem>>, vector<1x1x128xf32>
    %117 = vector.shape_cast %116 : vector<1x1x128xf32> to vector<1x128xf32>
    %118 = vector.broadcast %117 : vector<1x128xf32> to vector<16x128xf32>
    %119 = arith.mulf %114, %118 : vector<16x128xf32>
    %120 = arith.index_cast %arg1 : i32 to index
    %c0_49 = arith.constant 0 : index
    %c0_50 = arith.constant 0 : index
    %121 = vector.load %arg14[%120, %c0_49, %c0_50] : memref<2x1x128xf32, #tpu.memory_space<vmem>>, vector<1x1x128xf32>
    %122 = vector.shape_cast %121 : vector<1x1x128xf32> to vector<1x128xf32>
    %123 = vector.broadcast %122 : vector<1x128xf32> to vector<16x128xf32>
    %124 = arith.addf %119, %123 : vector<16x128xf32>
    %c1_i32 = arith.constant 1 : i32
    %125 = arith.cmpi slt, %arg1, %c1_i32 : i32
    %126 = arith.extui %125 : i1 to i32
    %c0_i32_51 = arith.constant 0 : i32
    %127 = arith.cmpi ne, %126, %c0_i32_51 : i32
    scf.if %127 {
      %c0_54 = arith.constant 0 : index
      %c0_55 = arith.constant 0 : index
      %131 = vector.load %arg21[%c0_54, %c0_55] : memref<16x128xf32, #tpu.memory_space<vmem>>, vector<16x128xf32>
      tpu.vector_store %arg21[%c0_54, %c0_55], %124 {strides = array<i32>} : memref<16x128xf32, #tpu.memory_space<vmem>>, vector<16x128xf32>,
      %c0_56 = arith.constant 0 : index
      %c0_57 = arith.constant 0 : index
      %132 = vector.load %arg21[%c0_56, %c0_57] : memref<16x128xf32, #tpu.memory_space<vmem>>, vector<4x128xf32>
      %c1_58 = arith.constant 1 : index
      %c8_59 = arith.constant 8 : index
      %c0_60 = arith.constant 0 : index
      %133 = vector.load %arg20[%c1_58, %c8_59, %c0_60] : memref<6x16x128xf32, #tpu.memory_space<vmem>>, vector<1x4x128xf32>
      %134 = vector.shape_cast %133 : vector<1x4x128xf32> to vector<4x128xf32>
      %135 = vector.shape_cast %132 : vector<4x128xf32> to vector<1x4x128xf32>
      tpu.vector_store %arg20[%c1_58, %c8_59, %c0_60], %135 {strides = array<i32>} : memref<6x16x128xf32, #tpu.memory_space<vmem>>, vector<1x4x128xf32>,
      %c4_61 = arith.constant 4 : index
      %c0_62 = arith.constant 0 : index
      %136 = vector.load %arg21[%c4_61, %c0_62] : memref<16x128xf32, #tpu.memory_space<vmem>>, vector<4x128xf32>
      %c2_63 = arith.constant 2 : index
      %c8_64 = arith.constant 8 : index
      %c0_65 = arith.constant 0 : index
      %137 = vector.load %arg20[%c2_63, %c8_64, %c0_65] : memref<6x16x128xf32, #tpu.memory_space<vmem>>, vector<1x4x128xf32>
      %138 = vector.shape_cast %137 : vector<1x4x128xf32> to vector<4x128xf32>
      %139 = vector.shape_cast %136 : vector<4x128xf32> to vector<1x4x128xf32>
      tpu.vector_store %arg20[%c2_63, %c8_64, %c0_65], %139 {strides = array<i32>} : memref<6x16x128xf32, #tpu.memory_space<vmem>>, vector<1x4x128xf32>,
      %c8_66 = arith.constant 8 : index
      %c0_67 = arith.constant 0 : index
      %140 = vector.load %arg21[%c8_66, %c0_67] : memref<16x128xf32, #tpu.memory_space<vmem>>, vector<4x128xf32>
      %c3 = arith.constant 3 : index
      %c8_68 = arith.constant 8 : index
      %c0_69 = arith.constant 0 : index
      %141 = vector.load %arg20[%c3, %c8_68, %c0_69] : memref<6x16x128xf32, #tpu.memory_space<vmem>>, vector<1x4x128xf32>
      %142 = vector.shape_cast %141 : vector<1x4x128xf32> to vector<4x128xf32>
      %143 = vector.shape_cast %140 : vector<4x128xf32> to vector<1x4x128xf32>
      tpu.vector_store %arg20[%c3, %c8_68, %c0_69], %143 {strides = array<i32>} : memref<6x16x128xf32, #tpu.memory_space<vmem>>, vector<1x4x128xf32>,
      %c12_70 = arith.constant 12 : index
      %c0_71 = arith.constant 0 : index
      %144 = vector.load %arg21[%c12_70, %c0_71] : memref<16x128xf32, #tpu.memory_space<vmem>>, vector<4x128xf32>
      %c4_72 = arith.constant 4 : index
      %c8_73 = arith.constant 8 : index
      %c0_74 = arith.constant 0 : index
      %145 = vector.load %arg20[%c4_72, %c8_73, %c0_74] : memref<6x16x128xf32, #tpu.memory_space<vmem>>, vector<1x4x128xf32>
      %146 = vector.shape_cast %145 : vector<1x4x128xf32> to vector<4x128xf32>
      %147 = vector.shape_cast %144 : vector<4x128xf32> to vector<1x4x128xf32>
      tpu.vector_store %arg20[%c4_72, %c8_73, %c0_74], %147 {strides = array<i32>} : memref<6x16x128xf32, #tpu.memory_space<vmem>>, vector<1x4x128xf32>,
    } else {
    }
    %c1_i32_52 = arith.constant 1 : i32
    %128 = arith.cmpi eq, %arg1, %c1_i32_52 : i32
    %129 = arith.extui %128 : i1 to i32
    %c0_i32_53 = arith.constant 0 : i32
    %130 = arith.cmpi ne, %129, %c0_i32_53 : i32
    scf.if %130 {
      %131 = arith.truncf %124 : vector<16x128xf32> to vector<16x128xbf16>
      %c0_54 = arith.constant 0 : index
      %c0_55 = arith.constant 0 : index
      %132 = vector.load %arg15[%c0_54, %c0_55] : memref<128x32xbf16, #tpu.memory_space<vmem>>, vector<128x32xbf16>
      %cst_56 = arith.constant dense<0.000000e+00> : vector<16x32xf32>
      %133 = tpu.matmul %131, %132, %cst_56 {dimension_numbers = #tpu.dot_dimension_numbers<[1], [0], [0], [1], [0, 0, 1, 1], [], []>} : vector<16x128xbf16>, vector<128x32xbf16>, vector<16x32xf32> -> vector<16x32xf32>
      %c0_57 = arith.constant 0 : index
      %c0_58 = arith.constant 0 : index
      %134 = vector.load %arg16[%c0_57, %c0_58] : memref<1x32xf32, #tpu.memory_space<vmem>>, vector<1x32xf32>
      %135 = vector.broadcast %134 : vector<1x32xf32> to vector<16x32xf32>
      %136 = arith.addf %133, %135 : vector<16x32xf32>
      %cst_59 = arith.constant 0.000000e+00 : f32
      %137 = vector.broadcast %cst_59 : f32 to vector<16x32xf32>
      %138 = arith.maximumf %136, %137 : vector<16x32xf32>
      %c0_60 = arith.constant 0 : index
      %c0_61 = arith.constant 0 : index
      %139 = vector.load %arg17[%c0_60, %c0_61] : memref<1x32xf32, #tpu.memory_space<vmem>>, vector<1x32xf32>
      %140 = vector.broadcast %139 : vector<1x32xf32> to vector<16x32xf32>
      %141 = arith.mulf %138, %140 : vector<16x32xf32>
      %c0_62 = arith.constant 0 : index
      %c0_63 = arith.constant 0 : index
      %142 = vector.load %arg18[%c0_62, %c0_63] : memref<1x32xf32, #tpu.memory_space<vmem>>, vector<1x32xf32>
      %143 = vector.broadcast %142 : vector<1x32xf32> to vector<16x32xf32>
      %144 = arith.addf %141, %143 : vector<16x32xf32>
      %c0_64 = arith.constant 0 : index
      %c0_65 = arith.constant 0 : index
      %c0_66 = arith.constant 0 : index
      %145 = vector.load %arg19[%c0_64, %c0_65, %c0_66] : memref<1x16x32xf32, #tpu.memory_space<vmem>>, vector<1x16x32xf32>
      %146 = vector.shape_cast %145 : vector<1x16x32xf32> to vector<16x32xf32>
      %147 = vector.shape_cast %144 : vector<16x32xf32> to vector<1x16x32xf32>
      tpu.vector_store %arg19[%c0_64, %c0_65, %c0_66], %147 {strides = array<i32>} : memref<1x16x32xf32, #tpu.memory_space<vmem>>, vector<1x16x32xf32>,
    } else {
    }
    return
  }
  func.func @transform_0(%arg0: i32, %arg1: i32) -> (i32, i32, i32) {
    %c0_i32 = arith.constant 0 : i32
    %c0_i32_0 = arith.constant 0 : i32
    %c0_i32_1 = arith.constant 0 : i32
    return %arg0, %c0_i32, %c0_i32_0 : i32, i32, i32
  }
  func.func @transform_1(%arg0: i32, %arg1: i32) -> (i32, i32) {
    %c0_i32 = arith.constant 0 : i32
    %c0_i32_0 = arith.constant 0 : i32
    %c0_i32_1 = arith.constant 0 : i32
    return %c0_i32, %c0_i32_0 : i32, i32
  }
  func.func @transform_2(%arg0: i32, %arg1: i32) -> (i32, i32) {
    %c0_i32 = arith.constant 0 : i32
    %c0_i32_0 = arith.constant 0 : i32
    %c0_i32_1 = arith.constant 0 : i32
    return %c0_i32, %c0_i32_0 : i32, i32
  }
  func.func @transform_3(%arg0: i32, %arg1: i32) -> (i32, i32) {
    %c0_i32 = arith.constant 0 : i32
    %c0_i32_0 = arith.constant 0 : i32
    %c0_i32_1 = arith.constant 0 : i32
    return %c0_i32, %c0_i32_0 : i32, i32
  }
  func.func @transform_4(%arg0: i32, %arg1: i32) -> (i32, i32) {
    %c0_i32 = arith.constant 0 : i32
    %c0_i32_0 = arith.constant 0 : i32
    %c0_i32_1 = arith.constant 0 : i32
    return %c0_i32, %c0_i32_0 : i32, i32
  }
  func.func @transform_5(%arg0: i32, %arg1: i32) -> (i32, i32, i32) {
    %c0_i32 = arith.constant 0 : i32
    %c0_i32_0 = arith.constant 0 : i32
    %c0_i32_1 = arith.constant 0 : i32
    %c0_i32_2 = arith.constant 0 : i32
    return %c0_i32, %c0_i32_0, %c0_i32_1 : i32, i32, i32
  }
  func.func @transform_6(%arg0: i32, %arg1: i32) -> (i32, i32, i32) {
    %c0_i32 = arith.constant 0 : i32
    %c0_i32_0 = arith.constant 0 : i32
    %c0_i32_1 = arith.constant 0 : i32
    %c0_i32_2 = arith.constant 0 : i32
    return %c0_i32, %c0_i32_0, %c0_i32_1 : i32, i32, i32
  }
  func.func @transform_7(%arg0: i32, %arg1: i32) -> (i32, i32, i32) {
    %c0_i32 = arith.constant 0 : i32
    %c0_i32_0 = arith.constant 0 : i32
    %c0_i32_1 = arith.constant 0 : i32
    %c0_i32_2 = arith.constant 0 : i32
    return %c0_i32, %c0_i32_0, %c0_i32_1 : i32, i32, i32
  }
  func.func @transform_8(%arg0: i32, %arg1: i32) -> (i32, i32, i32) {
    %c0_i32 = arith.constant 0 : i32
    %c0_i32_0 = arith.constant 0 : i32
    %c0_i32_1 = arith.constant 0 : i32
    %c0_i32_2 = arith.constant 0 : i32
    return %c0_i32, %c0_i32_0, %c0_i32_1 : i32, i32, i32
  }
  func.func @transform_9(%arg0: i32, %arg1: i32) -> (i32, i32, i32) {
    %c0_i32 = arith.constant 0 : i32
    %c0_i32_0 = arith.constant 0 : i32
    %c0_i32_1 = arith.constant 0 : i32
    %c0_i32_2 = arith.constant 0 : i32
    return %c0_i32, %c0_i32_0, %c0_i32_1 : i32, i32, i32
  }
  func.func @transform_10(%arg0: i32, %arg1: i32) -> (i32, i32, i32) {
    %c0_i32 = arith.constant 0 : i32
    %c0_i32_0 = arith.constant 0 : i32
    %c0_i32_1 = arith.constant 0 : i32
    %c0_i32_2 = arith.constant 0 : i32
    return %c0_i32, %c0_i32_0, %c0_i32_1 : i32, i32, i32
  }
  func.func @transform_11(%arg0: i32, %arg1: i32) -> (i32, i32, i32) {
    %c0_i32 = arith.constant 0 : i32
    %c0_i32_0 = arith.constant 0 : i32
    %c0_i32_1 = arith.constant 0 : i32
    %c0_i32_2 = arith.constant 0 : i32
    return %c0_i32, %c0_i32_0, %c0_i32_1 : i32, i32, i32
  }
  func.func @transform_12(%arg0: i32, %arg1: i32) -> (i32, i32, i32) {
    %c0_i32 = arith.constant 0 : i32
    %c0_i32_0 = arith.constant 0 : i32
    %c0_i32_1 = arith.constant 0 : i32
    %c0_i32_2 = arith.constant 0 : i32
    return %c0_i32, %c0_i32_0, %c0_i32_1 : i32, i32, i32
  }
  func.func @transform_13(%arg0: i32, %arg1: i32) -> (i32, i32) {
    %c0_i32 = arith.constant 0 : i32
    %c0_i32_0 = arith.constant 0 : i32
    %c0_i32_1 = arith.constant 0 : i32
    return %c0_i32, %c0_i32_0 : i32, i32
  }
  func.func @transform_14(%arg0: i32, %arg1: i32) -> (i32, i32) {
    %c0_i32 = arith.constant 0 : i32
    %c0_i32_0 = arith.constant 0 : i32
    %c0_i32_1 = arith.constant 0 : i32
    return %c0_i32, %c0_i32_0 : i32, i32
  }
  func.func @transform_15(%arg0: i32, %arg1: i32) -> (i32, i32) {
    %c0_i32 = arith.constant 0 : i32
    %c0_i32_0 = arith.constant 0 : i32
    %c0_i32_1 = arith.constant 0 : i32
    return %c0_i32, %c0_i32_0 : i32, i32
  }
  func.func @transform_16(%arg0: i32, %arg1: i32) -> (i32, i32) {
    %c0_i32 = arith.constant 0 : i32
    %c0_i32_0 = arith.constant 0 : i32
    %c0_i32_1 = arith.constant 0 : i32
    return %c0_i32, %c0_i32_0 : i32, i32
  }
  func.func @transform_17(%arg0: i32, %arg1: i32) -> (i32, i32, i32) {
    %c0_i32 = arith.constant 0 : i32
    %c0_i32_0 = arith.constant 0 : i32
    %c0_i32_1 = arith.constant 0 : i32
    return %arg0, %c0_i32, %c0_i32_0 : i32, i32, i32
  }
}

</mosaic_0001>

<llo_original>
// kernel: forward.1
$region0: #{forward.1}
  #allocation0 [shape = 'u32[]', space=smem, size = 0x4, offset = 0x4, fixed_abs, tag = 'smem constant byte address 0x4 - core index']
  #allocation1 [shape = 'u32[144,128]{1,0:T(1,128)}', space=vmem, size = 0x12000, scoped, tag = 'internal scratch']
  #allocation2 [shape = 'f32[6,16,128]{2,1,0:T(8,128)}', space=vmem, size = 0xc000, scoped, tag = 'scratch operand']
  #allocation3 [shape = 'f32[16,128]{1,0:T(8,128)}', space=vmem, size = 0x2000, scoped, tag = 'scratch operand']
  %s0 = inlined_call_operand.vmem [shape: bf16[2,16,32], index: 0, kind: input, shape index: {}]
  %s1 = inlined_call_operand.vmem [shape: bf16[32,128], index: 1, kind: input, shape index: {}]
  %s2 = inlined_call_operand.vmem [shape: f32[16,128], index: 2, kind: input, shape index: {}]
  %s3 = inlined_call_operand.vmem [shape: f32[1,128], index: 3, kind: input, shape index: {}]
  %s4 = inlined_call_operand.vmem [shape: f32[1,128], index: 4, kind: input, shape index: {}]
  %s5 = inlined_call_operand.vmem [shape: f32[2,9,128], index: 5, kind: input, shape index: {}]
  %s6 = inlined_call_operand.vmem [shape: f32[2,1,128], index: 6, kind: input, shape index: {}]
  %s7 = inlined_call_operand.vmem [shape: f32[2,1,128], index: 7, kind: input, shape index: {}]
  %s8 = inlined_call_operand.vmem [shape: f32[2,1,128], index: 8, kind: input, shape index: {}]
  %s9 = inlined_call_operand.vmem [shape: bf16[2,128,128], index: 9, kind: input, shape index: {}]
  %s10 = inlined_call_operand.vmem [shape: f32[2,1,128], index: 10, kind: input, shape index: {}]
  %s11 = inlined_call_operand.vmem [shape: f32[2,1,128], index: 11, kind: input, shape index: {}]
  %s12 = inlined_call_operand.vmem [shape: f32[2,1,128], index: 12, kind: input, shape index: {}]
  %s13 = inlined_call_operand.vmem [shape: bf16[128,32], index: 13, kind: input, shape index: {}]
  %s14 = inlined_call_operand.vmem [shape: f32[1,32], index: 14, kind: input, shape index: {}]
  %s15 = inlined_call_operand.vmem [shape: f32[1,32], index: 15, kind: input, shape index: {}]
  %s16 = inlined_call_operand.vmem [shape: f32[1,32], index: 16, kind: input, shape index: {}]
  %s17 = inlined_call_operand.vmem [shape: f32[2,16,32], index: 17, kind: output, shape index: {}]
  %s18 = sld [smem:[#allocation0]]
  $region113: #{forward.1} parent=0
    _
  %s20 = ssub.s32 1, %s18
  %s21 = scalar_select 0, %s20, %s18
  loop: start=0, step=1, limit=6
  $region2: #{forward.1} parent=0 // loop_pre_header
    _
  $region3: #{forward.1} parent=0 // loop_header
    %s23 = sphi 0, %s27
    %p24 = scmp.ge.s32.totalorder %s23, 6
    %s30 = sphi 0, %s42
    %s31 = sphi 0, %s38
    %s32 = sphi 0, %s30
    %s33 = sphi 0, %s31
    %s34 = sphi 0, %s32
    %s35 = sphi 0, %s33
    %s45 = sphi 0, %s47
    %s48 = sphi 0, %s45
    %s49 = sphi 0, %s48
    %s65 = sphi 0, %s49
    %s69 = sphi 0, %s69
    %s71 = sphi 0, %s69
    %s72 = sphi 0, %s71
    %s86 = sphi 0, %s72
    %s90 = sphi 0, %s90
    %s92 = sphi 0, %s90
    %s93 = sphi 0, %s92
    %s107 = sphi 0, %s93
    %s111 = sphi 0, %s111
    %s113 = sphi 0, %s111
    %s114 = sphi 0, %s113
    %s128 = sphi 0, %s114
    %s132 = sphi 0, %s132
    %s134 = sphi 0, %s132
    %s135 = sphi 0, %s134
    %s149 = sphi 0, %s135
    %s153 = sphi 0, %s153
    %s155 = sphi 0, %s153
    %s156 = sphi 0, %s155
    %s170 = sphi 0, %s156
    %s174 = sphi 0, %s174
    %s176 = sphi 0, %s174
    %s177 = sphi 0, %s176
    %s191 = sphi 0, %s177
    %s195 = sphi 0, %s195
    %s197 = sphi 0, %s195
    %s198 = sphi 0, %s197
    %s212 = sphi 0, %s198
    %s216 = sphi 0, %s216
    %s218 = sphi 0, %s216
    %s219 = sphi 0, %s218
    %s233 = sphi 0, %s219
    %s237 = sphi 0, %s237
    %s239 = sphi 0, %s237
    %s240 = sphi 0, %s239
    %s254 = sphi 0, %s240
    %s258 = sphi 0, %s258
    %s260 = sphi 0, %s258
    %s261 = sphi 0, %s260
    %s275 = sphi 0, %s261
    %s279 = sphi 0, %s279
    %s281 = sphi 0, %s279
    %s282 = sphi 0, %s281
    %s296 = sphi 0, %s282
    %s300 = sphi 0, %s300
    %s302 = sphi 0, %s300
    %s303 = sphi 0, %s302
    %s317 = sphi 0, %s303
    %s321 = sphi 0, %s321
    %s323 = sphi 0, %s321
    %s324 = sphi 0, %s323
    %s338 = sphi 0, %s324
    %s342 = sphi 0, %s342
    %s344 = sphi 0, %s342
    %s345 = sphi 0, %s344
    %s359 = sphi 0, %s345
    %s363 = sphi 0, %s363
    %s365 = sphi 0, %s363
    %s366 = sphi 0, %s365
    %s380 = sphi 0, %s366
    %s384 = sphi 0, %s384
    %s386 = sphi 0, %s384
    %s387 = sphi 0, %s386
    %s401 = sphi 0, %s387
    %s407 = sphi 0, %s409
    %s410 = sphi 0, %s407
    %s411 = sphi 0, %s410
    %s427 = sphi 0, %s411
  $region4: #{forward.1} parent=0 // loop_header_branch
    %26 = sbr.rel (%p24) target = $region8
  $region5: #{forward.1} parent=0 // loop_body
    %s28 = ssub.s32 %s23, 1
    %s29 = ssub.s32 %s23, 2
    %s36 = sadd.s32 1, %s31
    %p37 = scmp.ge.s32.totalorder %s36, 2
    %s38 = scalar_select %p37, 0, %s36
    %s39 = sadd.s32 1, %s30
    %s40 = scalar_select %p37, %s39, %s30
    %p41 = scmp.ge.s32.totalorder %s40, 2
    %s42 = scalar_select %p41, 0, %s40
    %s43 = ssub.s32 %s30, %s42
    %p44 = scmp.eq.s32.totalorder %s43, 0
    %s46 = sadd.s32 %s45, 1
    %s47 = scalar_select %p44, %s45, %s46
    %p50 = pneg %p44
    %p51 = scmp.eq.s32.totalorder %s23, 3
    %p52 = por %p50, %p51
    %p53 = scmp.ne.s32.totalorder %s45, %s48
    %p54 = scmp.eq.s32.totalorder %s23, 0
    %p55 = por %p53, %p54
    %p56 = scmp.ne.s32.totalorder %s45, %s48
    %p57 = scmp.eq.s32.totalorder %s28, 3
    %p58 = por %p56, %p57
    %p59 = scmp.ne.s32.totalorder %s48, %s49
    %p60 = scmp.eq.s32.totalorder %s28, 0
    %p61 = por %p59, %p60
    %p62 = scmp.ne.s32.totalorder %s48, %s49
    %p63 = scmp.eq.s32.totalorder %s29, 3
    %p64 = por %p62, %p63
    %p66 = scmp.ne.s32.totalorder %s49, %s65
    %p67 = scmp.eq.s32.totalorder %s29, 0
    %p68 = por %p66, %p67
    %s70 = sadd.s32 %s69, 1
    %p73 = scmp.eq.s32.totalorder %s23, 3
    %p74 = scmp.ne.s32.totalorder %s69, %s71
    %p75 = scmp.eq.s32.totalorder %s23, 0
    %p76 = por %p74, %p75
    %p77 = scmp.ne.s32.totalorder %s69, %s71
    %p78 = scmp.eq.s32.totalorder %s28, 3
    %p79 = por %p77, %p78
    %p80 = scmp.ne.s32.totalorder %s71, %s72
    %p81 = scmp.eq.s32.totalorder %s28, 0
    %p82 = por %p80, %p81
    %p83 = scmp.ne.s32.totalorder %s71, %s72
    %p84 = scmp.eq.s32.totalorder %s29, 3
    %p85 = por %p83, %p84
    %p87 = scmp.ne.s32.totalorder %s72, %s86
    %p88 = scmp.eq.s32.totalorder %s29, 0
    %p89 = por %p87, %p88
    %s91 = sadd.s32 %s90, 1
    %p94 = scmp.eq.s32.totalorder %s23, 3
    %p95 = scmp.ne.s32.totalorder %s90, %s92
    %p96 = scmp.eq.s32.totalorder %s23, 0
    %p97 = por %p95, %p96
    %p98 = scmp.ne.s32.totalorder %s90, %s92
    %p99 = scmp.eq.s32.totalorder %s28, 3
    %p100 = por %p98, %p99
    %p101 = scmp.ne.s32.totalorder %s92, %s93
    %p102 = scmp.eq.s32.totalorder %s28, 0
    %p103 = por %p101, %p102
    %p104 = scmp.ne.s32.totalorder %s92, %s93
    %p105 = scmp.eq.s32.totalorder %s29, 3
    %p106 = por %p104, %p105
    %p108 = scmp.ne.s32.totalorder %s93, %s107
    %p109 = scmp.eq.s32.totalorder %s29, 0
    %p110 = por %p108, %p109
    %s112 = sadd.s32 %s111, 1
    %p115 = scmp.eq.s32.totalorder %s23, 3
    %p116 = scmp.ne.s32.totalorder %s111, %s113
    %p117 = scmp.eq.s32.totalorder %s23, 0
    %p118 = por %p116, %p117
    %p119 = scmp.ne.s32.totalorder %s111, %s113
    %p120 = scmp.eq.s32.totalorder %s28, 3
    %p121 = por %p119, %p120
    %p122 = scmp.ne.s32.totalorder %s113, %s114
    %p123 = scmp.eq.s32.totalorder %s28, 0
    %p124 = por %p122, %p123
    %p125 = scmp.ne.s32.totalorder %s113, %s114
    %p126 = scmp.eq.s32.totalorder %s29, 3
    %p127 = por %p125, %p126
    %p129 = scmp.ne.s32.totalorder %s114, %s128
    %p130 = scmp.eq.s32.totalorder %s29, 0
    %p131 = por %p129, %p130
    %s133 = sadd.s32 %s132, 1
    %p136 = scmp.eq.s32.totalorder %s23, 3
    %p137 = scmp.ne.s32.totalorder %s132, %s134
    %p138 = scmp.eq.s32.totalorder %s23, 0
    %p139 = por %p137, %p138
    %p140 = scmp.ne.s32.totalorder %s132, %s134
    %p141 = scmp.eq.s32.totalorder %s28, 3
    %p142 = por %p140, %p141
    %p143 = scmp.ne.s32.totalorder %s134, %s135
    %p144 = scmp.eq.s32.totalorder %s28, 0
    %p145 = por %p143, %p144
    %p146 = scmp.ne.s32.totalorder %s134, %s135
    %p147 = scmp.eq.s32.totalorder %s29, 3
    %p148 = por %p146, %p147
    %p150 = scmp.ne.s32.totalorder %s135, %s149
    %p151 = scmp.eq.s32.totalorder %s29, 0
    %p152 = por %p150, %p151
    %s154 = sadd.s32 %s153, 1
    %p157 = scmp.eq.s32.totalorder %s23, 3
    %p158 = scmp.ne.s32.totalorder %s153, %s155
    %p159 = scmp.eq.s32.totalorder %s23, 0
    %p160 = por %p158, %p159
    %p161 = scmp.ne.s32.totalorder %s153, %s155
    %p162 = scmp.eq.s32.totalorder %s28, 3
    %p163 = por %p161, %p162
    %p164 = scmp.ne.s32.totalorder %s155, %s156
    %p165 = scmp.eq.s32.totalorder %s28, 0
    %p166 = por %p164, %p165
    %p167 = scmp.ne.s32.totalorder %s155, %s156
    %p168 = scmp.eq.s32.totalorder %s29, 3
    %p169 = por %p167, %p168
    %p171 = scmp.ne.s32.totalorder %s156, %s170
    %p172 = scmp.eq.s32.totalorder %s29, 0
    %p173 = por %p171, %p172
    %s175 = sadd.s32 %s174, 1
    %p178 = scmp.eq.s32.totalorder %s23, 3
    %p179 = scmp.ne.s32.totalorder %s174, %s176
    %p180 = scmp.eq.s32.totalorder %s23, 0
    %p181 = por %p179, %p180
    %p182 = scmp.ne.s32.totalorder %s174, %s176
    %p183 = scmp.eq.s32.totalorder %s28, 3
    %p184 = por %p182, %p183
    %p185 = scmp.ne.s32.totalorder %s176, %s177
    %p186 = scmp.eq.s32.totalorder %s28, 0
    %p187 = por %p185, %p186
    %p188 = scmp.ne.s32.totalorder %s176, %s177
    %p189 = scmp.eq.s32.totalorder %s29, 3
    %p190 = por %p188, %p189
    %p192 = scmp.ne.s32.totalorder %s177, %s191
    %p193 = scmp.eq.s32.totalorder %s29, 0
    %p194 = por %p192, %p193
    %s196 = sadd.s32 %s195, 1
    %p199 = scmp.eq.s32.totalorder %s23, 3
    %p200 = scmp.ne.s32.totalorder %s195, %s197
    %p201 = scmp.eq.s32.totalorder %s23, 0
    %p202 = por %p200, %p201
    %p203 = scmp.ne.s32.totalorder %s195, %s197
    %p204 = scmp.eq.s32.totalorder %s28, 3
    %p205 = por %p203, %p204
    %p206 = scmp.ne.s32.totalorder %s197, %s198
    %p207 = scmp.eq.s32.totalorder %s28, 0
    %p208 = por %p206, %p207
    %p209 = scmp.ne.s32.totalorder %s197, %s198
    %p210 = scmp.eq.s32.totalorder %s29, 3
    %p211 = por %p209, %p210
    %p213 = scmp.ne.s32.totalorder %s198, %s212
    %p214 = scmp.eq.s32.totalorder %s29, 0
    %p215 = por %p213, %p214
    %s217 = sadd.s32 %s216, 1
    %p220 = scmp.eq.s32.totalorder %s23, 3
    %p221 = scmp.ne.s32.totalorder %s216, %s218
    %p222 = scmp.eq.s32.totalorder %s23, 0
    %p223 = por %p221, %p222
    %p224 = scmp.ne.s32.totalorder %s216, %s218
    %p225 = scmp.eq.s32.totalorder %s28, 3
    %p226 = por %p224, %p225
    %p227 = scmp.ne.s32.totalorder %s218, %s219
    %p228 = scmp.eq.s32.totalorder %s28, 0
    %p229 = por %p227, %p228
    %p230 = scmp.ne.s32.totalorder %s218, %s219
    %p231 = scmp.eq.s32.totalorder %s29, 3
    %p232 = por %p230, %p231
    %p234 = scmp.ne.s32.totalorder %s219, %s233
    %p235 = scmp.eq.s32.totalorder %s29, 0
    %p236 = por %p234, %p235
    %s238 = sadd.s32 %s237, 1
    %p241 = scmp.eq.s32.totalorder %s23, 3
    %p242 = scmp.ne.s32.totalorder %s237, %s239
    %p243 = scmp.eq.s32.totalorder %s23, 0
    %p244 = por %p242, %p243
    %p245 = scmp.ne.s32.totalorder %s237, %s239
    %p246 = scmp.eq.s32.totalorder %s28, 3
    %p247 = por %p245, %p246
    %p248 = scmp.ne.s32.totalorder %s239, %s240
    %p249 = scmp.eq.s32.totalorder %s28, 0
    %p250 = por %p248, %p249
    %p251 = scmp.ne.s32.totalorder %s239, %s240
    %p252 = scmp.eq.s32.totalorder %s29, 3
    %p253 = por %p251, %p252
    %p255 = scmp.ne.s32.totalorder %s240, %s254
    %p256 = scmp.eq.s32.totalorder %s29, 0
    %p257 = por %p255, %p256
    %s259 = sadd.s32 %s258, 1
    %p262 = scmp.eq.s32.totalorder %s23, 3
    %p263 = scmp.ne.s32.totalorder %s258, %s260
    %p264 = scmp.eq.s32.totalorder %s23, 0
    %p265 = por %p263, %p264
    %p266 = scmp.ne.s32.totalorder %s258, %s260
    %p267 = scmp.eq.s32.totalorder %s28, 3
    %p268 = por %p266, %p267
    %p269 = scmp.ne.s32.totalorder %s260, %s261
    %p270 = scmp.eq.s32.totalorder %s28, 0
    %p271 = por %p269, %p270
    %p272 = scmp.ne.s32.totalorder %s260, %s261
    %p273 = scmp.eq.s32.totalorder %s29, 3
    %p274 = por %p272, %p273
    %p276 = scmp.ne.s32.totalorder %s261, %s275
    %p277 = scmp.eq.s32.totalorder %s29, 0
    %p278 = por %p276, %p277
    %s280 = sadd.s32 %s279, 1
    %p283 = scmp.eq.s32.totalorder %s23, 3
    %p284 = scmp.ne.s32.totalorder %s279, %s281
    %p285 = scmp.eq.s32.totalorder %s23, 0
    %p286 = por %p284, %p285
    %p287 = scmp.ne.s32.totalorder %s279, %s281
    %p288 = scmp.eq.s32.totalorder %s28, 3
    %p289 = por %p287, %p288
    %p290 = scmp.ne.s32.totalorder %s281, %s282
    %p291 = scmp.eq.s32.totalorder %s28, 0
    %p292 = por %p290, %p291
    %p293 = scmp.ne.s32.totalorder %s281, %s282
    %p294 = scmp.eq.s32.totalorder %s29, 3
    %p295 = por %p293, %p294
    %p297 = scmp.ne.s32.totalorder %s282, %s296
    %p298 = scmp.eq.s32.totalorder %s29, 0
    %p299 = por %p297, %p298
    %s301 = sadd.s32 %s300, 1
    %p304 = scmp.eq.s32.totalorder %s23, 3
    %p305 = scmp.ne.s32.totalorder %s300, %s302
    %p306 = scmp.eq.s32.totalorder %s23, 0
    %p307 = por %p305, %p306
    %p308 = scmp.ne.s32.totalorder %s300, %s302
    %p309 = scmp.eq.s32.totalorder %s28, 3
    %p310 = por %p308, %p309
    %p311 = scmp.ne.s32.totalorder %s302, %s303
    %p312 = scmp.eq.s32.totalorder %s28, 0
    %p313 = por %p311, %p312
    %p314 = scmp.ne.s32.totalorder %s302, %s303
    %p315 = scmp.eq.s32.totalorder %s29, 3
    %p316 = por %p314, %p315
    %p318 = scmp.ne.s32.totalorder %s303, %s317
    %p319 = scmp.eq.s32.totalorder %s29, 0
    %p320 = por %p318, %p319
    %s322 = sadd.s32 %s321, 1
    %p325 = scmp.eq.s32.totalorder %s23, 3
    %p326 = scmp.ne.s32.totalorder %s321, %s323
    %p327 = scmp.eq.s32.totalorder %s23, 0
    %p328 = por %p326, %p327
    %p329 = scmp.ne.s32.totalorder %s321, %s323
    %p330 = scmp.eq.s32.totalorder %s28, 3
    %p331 = por %p329, %p330
    %p332 = scmp.ne.s32.totalorder %s323, %s324
    %p333 = scmp.eq.s32.totalorder %s28, 0
    %p334 = por %p332, %p333
    %p335 = scmp.ne.s32.totalorder %s323, %s324
    %p336 = scmp.eq.s32.totalorder %s29, 3
    %p337 = por %p335, %p336
    %p339 = scmp.ne.s32.totalorder %s324, %s338
    %p340 = scmp.eq.s32.totalorder %s29, 0
    %p341 = por %p339, %p340
    %s343 = sadd.s32 %s342, 1
    %p346 = scmp.eq.s32.totalorder %s23, 3
    %p347 = scmp.ne.s32.totalorder %s342, %s344
    %p348 = scmp.eq.s32.totalorder %s23, 0
    %p349 = por %p347, %p348
    %p350 = scmp.ne.s32.totalorder %s342, %s344
    %p351 = scmp.eq.s32.totalorder %s28, 3
    %p352 = por %p350, %p351
    %p353 = scmp.ne.s32.totalorder %s344, %s345
    %p354 = scmp.eq.s32.totalorder %s28, 0
    %p355 = por %p353, %p354
    %p356 = scmp.ne.s32.totalorder %s344, %s345
    %p357 = scmp.eq.s32.totalorder %s29, 3
    %p358 = por %p356, %p357
    %p360 = scmp.ne.s32.totalorder %s345, %s359
    %p361 = scmp.eq.s32.totalorder %s29, 0
    %p362 = por %p360, %p361
    %s364 = sadd.s32 %s363, 1
    %p367 = scmp.eq.s32.totalorder %s23, 3
    %p368 = scmp.ne.s32.totalorder %s363, %s365
    %p369 = scmp.eq.s32.totalorder %s23, 0
    %p370 = por %p368, %p369
    %p371 = scmp.ne.s32.totalorder %s363, %s365
    %p372 = scmp.eq.s32.totalorder %s28, 3
    %p373 = por %p371, %p372
    %p374 = scmp.ne.s32.totalorder %s365, %s366
    %p375 = scmp.eq.s32.totalorder %s28, 0
    %p376 = por %p374, %p375
    %p377 = scmp.ne.s32.totalorder %s365, %s366
    %p378 = scmp.eq.s32.totalorder %s29, 3
    %p379 = por %p377, %p378
    %p381 = scmp.ne.s32.totalorder %s366, %s380
    %p382 = scmp.eq.s32.totalorder %s29, 0
    %p383 = por %p381, %p382
    %s385 = sadd.s32 %s384, 1
    %p388 = scmp.eq.s32.totalorder %s23, 3
    %p389 = scmp.ne.s32.totalorder %s384, %s386
    %p390 = scmp.eq.s32.totalorder %s23, 0
    %p391 = por %p389, %p390
    %p392 = scmp.ne.s32.totalorder %s384, %s386
    %p393 = scmp.eq.s32.totalorder %s28, 3
    %p394 = por %p392, %p393
    %p395 = scmp.ne.s32.totalorder %s386, %s387
    %p396 = scmp.eq.s32.totalorder %s28, 0
    %p397 = por %p395, %p396
    %p398 = scmp.ne.s32.totalorder %s386, %s387
    %p399 = scmp.eq.s32.totalorder %s29, 3
    %p400 = por %p398, %p399
    %p402 = scmp.ne.s32.totalorder %s387, %s401
    %p403 = scmp.eq.s32.totalorder %s29, 0
    %p404 = por %p402, %p403
    %s405 = ssub.s32 %s30, %s42
    %p406 = scmp.eq.s32.totalorder %s405, 0
    %s408 = sadd.s32 %s407, 1
    %s409 = scalar_select %p406, %s407, %s408
    %p412 = pneg %p406
    %p413 = scmp.eq.s32.totalorder %s23, 3
    %p414 = por %p412, %p413
    %p415 = scmp.ne.s32.totalorder %s407, %s410
    %p416 = scmp.eq.s32.totalorder %s23, 0
    %p417 = por %p415, %p416
    %p418 = scmp.ne.s32.totalorder %s407, %s410
    %p419 = scmp.eq.s32.totalorder %s28, 3
    %p420 = por %p418, %p419
    %p421 = scmp.ne.s32.totalorder %s410, %s411
    %p422 = scmp.eq.s32.totalorder %s28, 0
    %p423 = por %p421, %p422
    %p424 = scmp.ne.s32.totalorder %s410, %s411
    %p425 = scmp.eq.s32.totalorder %s29, 3
    %p426 = por %p424, %p425
    %p428 = scmp.ne.s32.totalorder %s411, %s427
    %p429 = scmp.eq.s32.totalorder %s29, 0
    %p430 = por %p428, %p429
    %p431 = scmp.le.s32.totalorder 1, %s23
    %p432 = scmp.lt.s32.totalorder %s23, 5
    %p433 = pnand %p431, %p432
    %p434 = pneg %p433
    // Predicated region
    $region9: #{forward.1} parent=5 // pred_check
      _
    $region10: #{forward.1} parent=5 // pred_check_branch
      %436 = sbr.rel (%p433) target = $region12
    $region11: #{forward.1} parent=5 // pred_region
      %s437 = ssub.s32 %s23, 1
      // Predicated region
      $region13: #{forward.1} parent=11 // pred_check
        %p438 = pneg %p82
      $region14: #{forward.1} parent=11 // pred_check_branch
        %440 = sbr.rel (%p438) target = $region16
      $region15: #{forward.1} parent=11 // pred_region
        _
      $region16: #{forward.1} parent=11 // pred_fallthru
        _
      // Predicated region
      $region17: #{forward.1} parent=11 // pred_check
        %p441 = pneg %p103
      $region18: #{forward.1} parent=11 // pred_check_branch
        %443 = sbr.rel (%p441) target = $region20
      $region19: #{forward.1} parent=11 // pred_region
        _
      $region20: #{forward.1} parent=11 // pred_fallthru
        _
      // Predicated region
      $region21: #{forward.1} parent=11 // pred_check
        %p444 = pneg %p124
      $region22: #{forward.1} parent=11 // pred_check_branch
        %446 = sbr.rel (%p444) target = $region24
      $region23: #{forward.1} parent=11 // pred_region
        _
      $region24: #{forward.1} parent=11 // pred_fallthru
        _
      // Predicated region
      $region25: #{forward.1} parent=11 // pred_check
        %p447 = pneg %p145
      $region26: #{forward.1} parent=11 // pred_check_branch
        %449 = sbr.rel (%p447) target = $region28
      $region27: #{forward.1} parent=11 // pred_region
        _
      $region28: #{forward.1} parent=11 // pred_fallthru
        _
      // Predicated region
      $region29: #{forward.1} parent=11 // pred_check
        %p450 = pneg %p166
      $region30: #{forward.1} parent=11 // pred_check_branch
        %452 = sbr.rel (%p450) target = $region32
      $region31: #{forward.1} parent=11 // pred_region
        _
      $region32: #{forward.1} parent=11 // pred_fallthru
        _
      // Predicated region
      $region33: #{forward.1} parent=11 // pred_check
        %p453 = pneg %p187
      $region34: #{forward.1} parent=11 // pred_check_branch
        %455 = sbr.rel (%p453) target = $region36
      $region35: #{forward.1} parent=11 // pred_region
        _
      $region36: #{forward.1} parent=11 // pred_fallthru
        _
      // Predicated region
      $region37: #{forward.1} parent=11 // pred_check
        %p456 = pneg %p208
      $region38: #{forward.1} parent=11 // pred_check_branch
        %458 = sbr.rel (%p456) target = $region40
      $region39: #{forward.1} parent=11 // pred_region
        _
      $region40: #{forward.1} parent=11 // pred_fallthru
        _
      // Predicated region
      $region41: #{forward.1} parent=11 // pred_check
        %p459 = pneg %p229
      $region42: #{forward.1} parent=11 // pred_check_branch
        %461 = sbr.rel (%p459) target = $region44
      $region43: #{forward.1} parent=11 // pred_region
        _
      $region44: #{forward.1} parent=11 // pred_fallthru
        _
      // Predicated region
      $region45: #{forward.1} parent=11 // pred_check
        %p462 = pneg %p250
      $region46: #{forward.1} parent=11 // pred_check_branch
        %464 = sbr.rel (%p462) target = $region48
      $region47: #{forward.1} parent=11 // pred_region
        _
      $region48: #{forward.1} parent=11 // pred_fallthru
        _
      // Predicated region
      $region49: #{forward.1} parent=11 // pred_check
        %p465 = pneg %p271
      $region50: #{forward.1} parent=11 // pred_check_branch
        %467 = sbr.rel (%p465) target = $region52
      $region51: #{forward.1} parent=11 // pred_region
        _
      $region52: #{forward.1} parent=11 // pred_fallthru
        _
      // Predicated region
      $region53: #{forward.1} parent=11 // pred_check
        %p468 = pneg %p292
      $region54: #{forward.1} parent=11 // pred_check_branch
        %470 = sbr.rel (%p468) target = $region56
      $region55: #{forward.1} parent=11 // pred_region
        _
      $region56: #{forward.1} parent=11 // pred_fallthru
        _
      // Predicated region
      $region57: #{forward.1} parent=11 // pred_check
        %p471 = pneg %p313
      $region58: #{forward.1} parent=11 // pred_check_branch
        %473 = sbr.rel (%p471) target = $region60
      $region59: #{forward.1} parent=11 // pred_region
        _
      $region60: #{forward.1} parent=11 // pred_fallthru
        _
      // Predicated region
      $region61: #{forward.1} parent=11 // pred_check
        %p474 = pneg %p334
      $region62: #{forward.1} parent=11 // pred_check_branch
        %476 = sbr.rel (%p474) target = $region64
      $region63: #{forward.1} parent=11 // pred_region
        _
      $region64: #{forward.1} parent=11 // pred_fallthru
        _
      // Predicated region
      $region65: #{forward.1} parent=11 // pred_check
        %p477 = pneg %p355
      $region66: #{forward.1} parent=11 // pred_check_branch
        %479 = sbr.rel (%p477) target = $region68
      $region67: #{forward.1} parent=11 // pred_region
        _
      $region68: #{forward.1} parent=11 // pred_fallthru
        _
      // Predicated region
      $region69: #{forward.1} parent=11 // pred_check
        %p480 = pneg %p376
      $region70: #{forward.1} parent=11 // pred_check_branch
        %482 = sbr.rel (%p480) target = $region72
      $region71: #{forward.1} parent=11 // pred_region
        _
      $region72: #{forward.1} parent=11 // pred_fallthru
        _
      // Predicated region
      $region73: #{forward.1} parent=11 // pred_check
        %p483 = pneg %p397
      $region74: #{forward.1} parent=11 // pred_check_branch
        %485 = sbr.rel (%p483) target = $region76
      $region75: #{forward.1} parent=11 // pred_region
        _
      $region76: #{forward.1} parent=11 // pred_fallthru
        _
    $region12: #{forward.1} parent=5 // pred_fallthru
      _
    %p486 = scmp.lt.s32.totalorder %s23, 4
    // Predicated region
    $region77: #{forward.1} parent=5 // pred_check
      %p487 = pneg %p486
    $region78: #{forward.1} parent=5 // pred_check_branch
      %489 = sbr.rel (%p487) target = $region80
    $region79: #{forward.1} parent=5 // pred_region
      // Predicated region
      $region81: #{forward.1} parent=79 // pred_check
        %p490 = pneg %p55
      $region82: #{forward.1} parent=79 // pred_check_branch
        %492 = sbr.rel (%p490) target = $region84
      $region83: #{forward.1} parent=79 // pred_region
        %p493 = scmp.lt.s32.totalorder %s30, 1
        %s494 = scalar_select %p493, %s30, 1
        %s495 = smul.addr %s494, 2
        %s496 = smul.addr %s495, 4
        %s497 = scalar_lea.vmem %s0, %s496
      $region84: #{forward.1} parent=79 // pred_fallthru
        _
    $region80: #{forward.1} parent=5 // pred_fallthru
      _
    %p498 = scmp.le.s32.totalorder 1, %s23
    %p499 = scmp.lt.s32.totalorder %s23, 5
    %p500 = pnand %p498, %p499
    %p501 = pneg %p500
    // Predicated region
    $region85: #{forward.1} parent=5 // pred_check
      _
    $region86: #{forward.1} parent=5 // pred_check_branch
      %503 = sbr.rel (%p500) target = $region88
    $region87: #{forward.1} parent=5 // pred_region
      %s504 = ssub.s32 %s23, 1
      %p505 = scmp.lt.s32.totalorder %s32, 1
      %s506 = scalar_select %p505, %s32, 1
      %s507 = smul.addr %s506, 2
      %s508 = smul.addr %s507, 4
      %s509 = scalar_lea.vmem %s0, %s508
      %p510 = pneg %p61
      %p511 = pneg %p58
      %p512 = pneg %p82
      %p513 = pneg %p79
      %p514 = pneg %p103
      %p515 = pneg %p100
      %p516 = pneg %p124
      %p517 = pneg %p121
      %p518 = pneg %p145
      %p519 = pneg %p142
      %p520 = pneg %p166
      %p521 = pneg %p163
      %p522 = pneg %p187
      %p523 = pneg %p184
      %p524 = pneg %p208
      %p525 = pneg %p205
      %p526 = pneg %p229
      %p527 = pneg %p226
      %p528 = pneg %p250
      %p529 = pneg %p247
      %p530 = pneg %p271
      %p531 = pneg %p268
      %p532 = pneg %p292
      %p533 = pneg %p289
      %p534 = pneg %p313
      %p535 = pneg %p310
      %p536 = pneg %p334
      %p537 = pneg %p331
      %p538 = pneg %p355
      %p539 = pneg %p352
      %p540 = pneg %p376
      %p541 = pneg %p373
      %p542 = pneg %p397
      %p543 = pneg %p394
      %p544 = pneg %p423
      %p545 = pneg %p420
      %p546 = scmp.lt.s32.totalorder %s32, 1
      %s547 = scalar_select %p546, %s32, 1
      %s548 = smul.addr %s547, 2
      %s549 = smul.addr %s548, 8
      %s550 = scalar_lea.vmem %s17, %s549
      %p551 = scmp.lt.s32.totalorder %s32, 1
      %s552 = scalar_select %p551, %s32, 1
      %s553 = smul.addr %s552, 2
      %s554 = smul.addr %s553, 4
      %s555 = scalar_lea.vmem %s0, %s554
      %p556 = scmp.lt.s32.totalorder %s32, 1
      %s557 = scalar_select %p556, %s32, 1
      %s558 = smul.addr %s557, 2
      %s559 = smul.addr %s558, 8
      %s560 = scalar_lea.vmem %s17, %s559
      %p562 = scmp.eq.s32.totalorder %s33, 0
      // Predicated region
      $region89: #{forward.1} parent=87 // pred_check
        %p563 = pneg %p562
      $region90: #{forward.1} parent=87 // pred_check_branch
        %565 = sbr.rel (%p563) target = $region92
      $region91: #{forward.1} parent=87 // pred_region
        %566 = vst [vmem:[#allocation2] sm:$0xff] 0.0
        %567 = vst [vmem:[#allocation2 + $0x8] sm:$0xff] 0.0
        %568 = vst [vmem:[#allocation2 + $0x10] sm:$0xff] 0.0
        %569 = vst [vmem:[#allocation2 + $0x18] sm:$0xff] 0.0
        %570 = vst [vmem:[#allocation2 + $0x20] sm:$0xff] 0.0
        %571 = vst [vmem:[#allocation2 + $0x28] sm:$0xff] 0.0
        %572 = vst [vmem:[#allocation2 + $0x30] sm:$0xff] 0.0
        %573 = vst [vmem:[#allocation2 + $0x38] sm:$0xff] 0.0
        %574 = vst [vmem:[#allocation2 + $0x40] sm:$0xff] 0.0
        %575 = vst [vmem:[#allocation2 + $0x48] sm:$0xff] 0.0
        %576 = vst [vmem:[#allocation2 + $0x50] sm:$0xff] 0.0
        %577 = vst [vmem:[#allocation2 + $0x58] sm:$0xff] 0.0
        %v578 = vld [vmem:[%s555] sm:$0xf]
        %v579 = vld [vmem:[%s555 + $0x4] sm:$0xf]
        %v580 = vld [vmem:[%s1] sm:$0xf]
        %v581 = vld [vmem:[%s1 + $0x4] sm:$0xf]
        %v582 = vld [vmem:[%s1 + $0x8] sm:$0xf]
        %v583 = vld [vmem:[%s1 + $0xc] sm:$0xf]
        %v584 = vld [vmem:[%s2] sm:$0xff]
        %v585 = vld [vmem:[%s2 + $0x8] sm:$0xff]
        %v588 = vunpack.c.l.b16 %v578
        %v589 = vunpack.c.l.b16 %v579
        %v590 = vpack.c.b16 %v589, %v588
        %v595 = vunpack.c.l.b16 %v580
        %v596 = vunpack.c.l.b16 %v581
        %v597 = vunpack.c.l.b16 %v582
        %v598 = vunpack.c.l.b16 %v583
        %v599 = vpack.c.b16 %v596, %v595
        %v600 = vpack.c.b16 %v598, %v597
        %vm603 = vcmask 261120
        %v605 = vsel %vm603, %v590, 0
        %607 = vmatprep.subr.bf16.mxu0 0
        %608 = vmatpush1.bf16.msra.mxu0 %v599
        %609 = vmatprep.subr.bf16.mxu0 0
        %610 = vmatpush1.bf16.msra.mxu0 %v600
        %611 = vmatprep.subr.bf16.mxu0 0
        %612 = vmatpush1.bf16.msra.mxu0 0
        %613 = vmatprep.subr.bf16.mxu0 0
        %614 = vmatpush1.bf16.msra.mxu0 0
        %615 = vmatprep.subr.bf16.mxu0 0
        %616 = vmatpush1.bf16.msra.mxu0 0
        %617 = vmatprep.subr.bf16.mxu0 0
        %618 = vmatpush1.bf16.msra.mxu0 0
        %619 = vmatprep.subr.bf16.mxu0 0
        %620 = vmatpush1.bf16.msra.mxu0 0
        %621 = vmatprep.subr.bf16.mxu0 0
        %622 = vmatpush1.bf16.msra.mxu0 0
        %623 = vmatprep.subr.bf16.mxu0 0
        %624 = vmatpush1.bf16.msra.mxu0 0
        %625 = vmatprep.subr.bf16.mxu0 0
        %626 = vmatpush1.bf16.msra.mxu0 0
        %627 = vmatprep.subr.bf16.mxu0 0
        %628 = vmatpush1.bf16.msra.mxu0 0
        %629 = vmatprep.subr.bf16.mxu0 0
        %630 = vmatpush1.bf16.msra.mxu0 0
        %631 = vmatprep.subr.bf16.mxu0 0
        %632 = vmatpush1.bf16.msra.mxu0 0
        %633 = vmatprep.subr.bf16.mxu0 0
        %634 = vmatpush1.bf16.msra.mxu0 0
        %635 = vmatprep.subr.bf16.mxu0 0
        %636 = vmatpush1.bf16.msra.mxu0 0
        %637 = vmatprep.subr.bf16.mxu0 0
        %638 = vmatpush1.bf16.msra.mxu0 0
        %639 = vmatprep.mubr.bf16.mxu0 0
        %640 = vmatmul.mubr.bf16.gmra.mrb[0].mxu0 %v605
        %v641 = vpop.f32.mrb[0].mxu0
        %v642 = vadd.f32 %v584, %v641
        %v643 = vpop.f32.mrb[0].mxu0
        %v644 = vpop.f32.mrb[0].mxu0
        %v645 = vadd.f32 %v585, %v644
        %v646 = vpop.f32.mrb[0].mxu0
        %647 = vdwg.mxu0
        %v648 = vmax.f32 %v642, 0.0
        %v649 = vmax.f32 %v645, 0.0
        %v650 = vld [vmem:[%s3] sm:$0x1]
        %v652 = vlaneseq
        %v653 = vshrl.u32 %v652, 7
        %v654 = vsub.s32 0, %v653
        %v655 = vrot.slane %v650, %v654
        %v657 = vmul.f32 %v648, %v655
        %v658 = vmul.f32 %v649, %v655
        %v659 = vld [vmem:[%s4] sm:$0x1]
        %v661 = vlaneseq
        %v662 = vshrl.u32 %v661, 7
        %v663 = vsub.s32 0, %v662
        %v664 = vrot.slane %v659, %v663
        %v666 = vadd.f32 %v657, %v664
        %v667 = vadd.f32 %v658, %v664
        %668 = vst [vmem:[#allocation3] sm:$0xff] %v666
        %669 = vst [vmem:[#allocation3 + $0x8] sm:$0xff] %v667
        %v670 = vld [vmem:[#allocation3] sm:$0xf]
        %s671 = scalar_lea.vmem [#allocation2], 16
        %672 = vst [vmem:[%s671 + $0x8] sm:$0xf] %v670
        %v673 = vld [vmem:[#allocation3 + $0x4] sm:$0xf]
        %s674 = scalar_lea.vmem [#allocation2], 32
        %675 = vst [vmem:[%s674 + $0x8] sm:$0xf] %v673
        %v676 = vld [vmem:[#allocation3 + $0x8] sm:$0xf]
        %s677 = scalar_lea.vmem [#allocation2], 48
        %678 = vst [vmem:[%s677 + $0x8] sm:$0xf] %v676
        %v679 = vld [vmem:[#allocation3 + $0xc] sm:$0xf]
        %s680 = scalar_lea.vmem [#allocation2], 64
        %681 = vst [vmem:[%s680 + $0x8] sm:$0xf] %v679
      $region92: #{forward.1} parent=87 // pred_fallthru
        _
      %s682 = smul.u32 %s33, 16
      %s683 = scalar_lea.vmem %s5, %s682
      %v684 = vld [vmem:[%s683] sm:$0xff]
      %v685 = vld [vmem:[%s683 + $0x8] sm:$0x1]
      %v686 = vld [vmem:[#allocation2 + $0x7] sm:$0xf]
      %v687 = vld [vmem:[#allocation2 + $0x17] sm:$0xf]
      %v688 = vld [vmem:[#allocation2 + $0x27] sm:$0xf]
      %v689 = vld [vmem:[#allocation2 + $0x37] sm:$0xf]
      %v690 = vlaneseq
      %v691 = vshrl.u32 %v690, 7
      %v692 = vsub.s32 0, %v691
      %v693 = vrot.slane %v684, %v692
      %v694 = vmul.f32 %v686, %v693
      %v695 = vmul.f32 %v687, %v693
      %v696 = vmul.f32 %v688, %v693
      %v697 = vmul.f32 %v689, %v693
      %v698 = vld [vmem:[#allocation2 + $0x8] sm:$0xf]
      %v699 = vld [vmem:[#allocation2 + $0x18] sm:$0xf]
      %v700 = vld [vmem:[#allocation2 + $0x28] sm:$0xf]
      %v701 = vld [vmem:[#allocation2 + $0x38] sm:$0xf]
      %v702 = vlaneseq
      %v703 = vshrl.u32 %v702, 7
      %v704 = vsub.s32 1, %v703
      %v705 = vrot.slane %v684, %v704
      %v706 = vmul.f32 %v698, %v705
      %v707 = vmul.f32 %v699, %v705
      %v708 = vmul.f32 %v700, %v705
      %v709 = vmul.f32 %v701, %v705
      %v710 = vadd.f32 %v694, %v706
      %v711 = vadd.f32 %v695, %v707
      %v712 = vadd.f32 %v696, %v708
      %v713 = vadd.f32 %v697, %v709
      %v714 = vld [vmem:[#allocation2 + $0x9] sm:$0xf]
      %v715 = vld [vmem:[#allocation2 + $0x19] sm:$0xf]
      %v716 = vld [vmem:[#allocation2 + $0x29] sm:$0xf]
      %v717 = vld [vmem:[#allocation2 + $0x39] sm:$0xf]
      %v718 = vlaneseq
      %v719 = vshrl.u32 %v718, 7
      %v720 = vsub.s32 2, %v719
      %v721 = vrot.slane %v684, %v720
      %v722 = vmul.f32 %v714, %v721
      %v723 = vmul.f32 %v715, %v721
      %v724 = vmul.f32 %v716, %v721
      %v725 = vmul.f32 %v717, %v721
      %v726 = vadd.f32 %v710, %v722
      %v727 = vadd.f32 %v711, %v723
      %v728 = vadd.f32 %v712, %v724
      %v729 = vadd.f32 %v713, %v725
      %s730 = scalar_lea.vmem [#allocation2], 16
      %v731 = vld [vmem:[%s730 + $0x7] sm:$0xf]
      %v732 = vld [vmem:[%s730 + $0x17] sm:$0xf]
      %v733 = vld [vmem:[%s730 + $0x27] sm:$0xf]
      %v734 = vld [vmem:[%s730 + $0x37] sm:$0xf]
      %v735 = vlaneseq
      %v736 = vshrl.u32 %v735, 7
      %v737 = vsub.s32 3, %v736
      %v738 = vrot.slane %v684, %v737
      %v739 = vmul.f32 %v731, %v738
      %v740 = vmul.f32 %v732, %v738
      %v741 = vmul.f32 %v733, %v738
      %v742 = vmul.f32 %v734, %v738
      %v743 = vadd.f32 %v726, %v739
      %v744 = vadd.f32 %v727, %v740
      %v745 = vadd.f32 %v728, %v741
      %v746 = vadd.f32 %v729, %v742
      %v747 = vld [vmem:[%s730 + $0x8] sm:$0xf]
      %v748 = vld [vmem:[%s730 + $0x18] sm:$0xf]
      %v749 = vld [vmem:[%s730 + $0x28] sm:$0xf]
      %v750 = vld [vmem:[%s730 + $0x38] sm:$0xf]
      %v751 = vlaneseq
      %v752 = vshrl.u32 %v751, 7
      %v753 = vsub.s32 4, %v752
      %v754 = vrot.slane %v684, %v753
      %v755 = vmul.f32 %v747, %v754
      %v756 = vmul.f32 %v748, %v754
      %v757 = vmul.f32 %v749, %v754
      %v758 = vmul.f32 %v750, %v754
      %v759 = vadd.f32 %v743, %v755
      %v760 = vadd.f32 %v744, %v756
      %v761 = vadd.f32 %v745, %v757
      %v762 = vadd.f32 %v746, %v758
      %v763 = vld [vmem:[%s730 + $0x9] sm:$0xf]
      %v764 = vld [vmem:[%s730 + $0x19] sm:$0xf]
      %v765 = vld [vmem:[%s730 + $0x29] sm:$0xf]
      %v766 = vld [vmem:[%s730 + $0x39] sm:$0xf]
      %v767 = vlaneseq
      %v768 = vshrl.u32 %v767, 7
      %v769 = vsub.s32 5, %v768
      %v770 = vrot.slane %v684, %v769
      %v771 = vmul.f32 %v763, %v770
      %v772 = vmul.f32 %v764, %v770
      %v773 = vmul.f32 %v765, %v770
      %v774 = vmul.f32 %v766, %v770
      %v775 = vadd.f32 %v759, %v771
      %v776 = vadd.f32 %v760, %v772
      %v777 = vadd.f32 %v761, %v773
      %v778 = vadd.f32 %v762, %v774
      %s779 = scalar_lea.vmem [#allocation2], 32
      %v780 = vld [vmem:[%s779 + $0x7] sm:$0xf]
      %v781 = vld [vmem:[%s779 + $0x17] sm:$0xf]
      %v782 = vld [vmem:[%s779 + $0x27] sm:$0xf]
      %v783 = vld [vmem:[%s779 + $0x37] sm:$0xf]
      %v784 = vlaneseq
      %v785 = vshrl.u32 %v784, 7
      %v786 = vsub.s32 6, %v785
      %v787 = vrot.slane %v684, %v786
      %v788 = vmul.f32 %v780, %v787
      %v789 = vmul.f32 %v781, %v787
      %v790 = vmul.f32 %v782, %v787
      %v791 = vmul.f32 %v783, %v787
      %v792 = vadd.f32 %v775, %v788
      %v793 = vadd.f32 %v776, %v789
      %v794 = vadd.f32 %v777, %v790
      %v795 = vadd.f32 %v778, %v791
      %v796 = vld [vmem:[%s779 + $0x8] sm:$0xf]
      %v797 = vld [vmem:[%s779 + $0x18] sm:$0xf]
      %v798 = vld [vmem:[%s779 + $0x28] sm:$0xf]
      %v799 = vld [vmem:[%s779 + $0x38] sm:$0xf]
      %v800 = vlaneseq
      %v801 = vshrl.u32 %v800, 7
      %v802 = vsub.s32 7, %v801
      %v803 = vrot.slane %v684, %v802
      %v804 = vmul.f32 %v796, %v803
      %v805 = vmul.f32 %v797, %v803
      %v806 = vmul.f32 %v798, %v803
      %v807 = vmul.f32 %v799, %v803
      %v808 = vadd.f32 %v792, %v804
      %v809 = vadd.f32 %v793, %v805
      %v810 = vadd.f32 %v794, %v806
      %v811 = vadd.f32 %v795, %v807
      %v812 = vld [vmem:[%s779 + $0x9] sm:$0xf]
      %v813 = vld [vmem:[%s779 + $0x19] sm:$0xf]
      %v814 = vld [vmem:[%s779 + $0x29] sm:$0xf]
      %v815 = vld [vmem:[%s779 + $0x39] sm:$0xf]
      %v816 = vlaneseq
      %v817 = vshrl.u32 %v816, 7
      %v818 = vsub.s32 0, %v817
      %v819 = vrot.slane %v685, %v818
      %v820 = vmul.f32 %v812, %v819
      %v821 = vmul.f32 %v813, %v819
      %v822 = vmul.f32 %v814, %v819
      %v823 = vmul.f32 %v815, %v819
      %v824 = vadd.f32 %v808, %v820
      %v825 = vadd.f32 %v809, %v821
      %v826 = vadd.f32 %v810, %v822
      %v827 = vadd.f32 %v811, %v823
      %s828 = scalar_lea.vmem %s6, %s33
      %v829 = vld [vmem:[%s828] sm:$0x1]
      %v831 = vlaneseq
      %v832 = vshrl.u32 %v831, 7
      %v833 = vsub.s32 0, %v832
      %v834 = vrot.slane %v829, %v833
      %v836 = vadd.f32 %v824, %v834
      %v837 = vadd.f32 %v825, %v834
      %v838 = vadd.f32 %v826, %v834
      %v839 = vadd.f32 %v827, %v834
      %v840 = vmax.f32 %v836, 0.0
      %v841 = vmax.f32 %v837, 0.0
      %v842 = vmax.f32 %v838, 0.0
      %v843 = vmax.f32 %v839, 0.0
      %s844 = scalar_lea.vmem %s7, %s33
      %v845 = vld [vmem:[%s844] sm:$0x1]
      %v847 = vlaneseq
      %v848 = vshrl.u32 %v847, 7
      %v849 = vsub.s32 0, %v848
      %v850 = vrot.slane %v845, %v849
      %v852 = vmul.f32 %v840, %v850
      %v853 = vmul.f32 %v841, %v850
      %v854 = vmul.f32 %v842, %v850
      %v855 = vmul.f32 %v843, %v850
      %s856 = scalar_lea.vmem %s8, %s33
      %v857 = vld [vmem:[%s856] sm:$0x1]
      %v859 = vlaneseq
      %v860 = vshrl.u32 %v859, 7
      %v861 = vsub.s32 0, %v860
      %v862 = vrot.slane %v857, %v861
      %v864 = vadd.f32 %v852, %v862
      %v865 = vadd.f32 %v853, %v862
      %v866 = vadd.f32 %v854, %v862
      %v867 = vadd.f32 %v855, %v862
      %v868 = vadd.f32 %v864, %v747
      %v869 = vadd.f32 %v865, %v748
      %v870 = vadd.f32 %v866, %v749
      %v871 = vadd.f32 %v867, %v750
      %872 = vst [vmem:[#allocation3] sm:$0xf] %v868
      %873 = vst [vmem:[#allocation3 + $0x4] sm:$0xf] %v869
      %874 = vst [vmem:[#allocation3 + $0x8] sm:$0xf] %v870
      %875 = vst [vmem:[#allocation3 + $0xc] sm:$0xf] %v871
      %v876 = vld [vmem:[#allocation3] sm:$0xff]
      %v877 = vld [vmem:[#allocation3 + $0x8] sm:$0xff]
      %v878 = vpack.c.bf16 %v877, %v876
      %s879 = smul.addr %s682, 4
      %s880 = scalar_lea.vmem %s9, %s879
      %v881 = vld [vmem:[%s880] sm:$0xf]
      %v882 = vld [vmem:[%s880 + $0x4] sm:$0xf]
      %v883 = vld [vmem:[%s880 + $0x8] sm:$0xf]
      %v884 = vld [vmem:[%s880 + $0xc] sm:$0xf]
      %v885 = vld [vmem:[%s880 + $0x10] sm:$0xf]
      %v886 = vld [vmem:[%s880 + $0x14] sm:$0xf]
      %v887 = vld [vmem:[%s880 + $0x18] sm:$0xf]
      %v888 = vld [vmem:[%s880 + $0x1c] sm:$0xf]
      %v889 = vld [vmem:[%s880 + $0x20] sm:$0xf]
      %v890 = vld [vmem:[%s880 + $0x24] sm:$0xf]
      %v891 = vld [vmem:[%s880 + $0x28] sm:$0xf]
      %v892 = vld [vmem:[%s880 + $0x2c] sm:$0xf]
      %v893 = vld [vmem:[%s880 + $0x30] sm:$0xf]
      %v894 = vld [vmem:[%s880 + $0x34] sm:$0xf]
      %v895 = vld [vmem:[%s880 + $0x38] sm:$0xf]
      %v896 = vld [vmem:[%s880 + $0x3c] sm:$0xf]
      %s897 = scalar_lea.vmem %s10, %s33
      %v898 = vld [vmem:[%s897] sm:$0x1]
      %v900 = vlaneseq
      %v901 = vshrl.u32 %v900, 7
      %v902 = vsub.s32 0, %v901
      %v903 = vrot.slane %v898, %v902
      %v921 = vunpack.c.l.b16 %v881
      %v922 = vunpack.c.l.b16 %v882
      %v923 = vunpack.c.l.b16 %v883
      %v924 = vunpack.c.l.b16 %v884
      %v925 = vunpack.c.l.b16 %v885
      %v926 = vunpack.c.l.b16 %v886
      %v927 = vunpack.c.l.b16 %v887
      %v928 = vunpack.c.l.b16 %v888
      %v929 = vunpack.c.l.b16 %v889
      %v930 = vunpack.c.l.b16 %v890
      %v931 = vunpack.c.l.b16 %v891
      %v932 = vunpack.c.l.b16 %v892
      %v933 = vunpack.c.l.b16 %v893
      %v934 = vunpack.c.l.b16 %v894
      %v935 = vunpack.c.l.b16 %v895
      %v936 = vunpack.c.l.b16 %v896
      %v937 = vpack.c.b16 %v922, %v921
      %v938 = vpack.c.b16 %v924, %v923
      %v939 = vpack.c.b16 %v926, %v925
      %v940 = vpack.c.b16 %v928, %v927
      %v941 = vpack.c.b16 %v930, %v929
      %v942 = vpack.c.b16 %v932, %v931
      %v943 = vpack.c.b16 %v934, %v933
      %v944 = vpack.c.b16 %v936, %v935
      %953 = vmatprep.subr.bf16.mxu0 0
      %954 = vmatpush1.bf16.msra.mxu0 %v937
      %955 = vmatprep.subr.bf16.mxu0 0
      %956 = vmatpush1.bf16.msra.mxu0 %v938
      %957 = vmatprep.subr.bf16.mxu0 0
      %958 = vmatpush1.bf16.msra.mxu0 %v939
      %959 = vmatprep.subr.bf16.mxu0 0
      %960 = vmatpush1.bf16.msra.mxu0 %v940
      %961 = vmatprep.subr.bf16.mxu0 0
      %962 = vmatpush1.bf16.msra.mxu0 %v941
      %963 = vmatprep.subr.bf16.mxu0 0
      %964 = vmatpush1.bf16.msra.mxu0 %v942
      %965 = vmatprep.subr.bf16.mxu0 0
      %966 = vmatpush1.bf16.msra.mxu0 %v943
      %967 = vmatprep.subr.bf16.mxu0 0
      %968 = vmatpush1.bf16.msra.mxu0 %v944
      %969 = vmatprep.subr.bf16.mxu0 0
      %970 = vmatpush1.bf16.msra.mxu0 0
      %971 = vmatprep.subr.bf16.mxu0 0
      %972 = vmatpush1.bf16.msra.mxu0 0
      %973 = vmatprep.subr.bf16.mxu0 0
      %974 = vmatpush1.bf16.msra.mxu0 0
      %975 = vmatprep.subr.bf16.mxu0 0
      %976 = vmatpush1.bf16.msra.mxu0 0
      %977 = vmatprep.subr.bf16.mxu0 0
      %978 = vmatpush1.bf16.msra.mxu0 0
      %979 = vmatprep.subr.bf16.mxu0 0
      %980 = vmatpush1.bf16.msra.mxu0 0
      %981 = vmatprep.subr.bf16.mxu0 0
      %982 = vmatpush1.bf16.msra.mxu0 0
      %983 = vmatprep.subr.bf16.mxu0 0
      %984 = vmatpush1.bf16.msra.mxu0 0
      %985 = vmatprep.mubr.bf16.mxu0 0
      %986 = vmatmul.mubr.bf16.gmra.mrb[0].mxu0 %v878
      %v987 = vpop.f32.mrb[0].mxu0
      %v988 = vadd.f32 %v903, %v987
      %v989 = vpop.f32.mrb[0].mxu0
      %v990 = vpop.f32.mrb[0].mxu0
      %v991 = vadd.f32 %v903, %v990
      %v992 = vpop.f32.mrb[0].mxu0
      %993 = vdwg.mxu0
      %v994 = vmax.f32 %v988, 0.0
      %v995 = vmax.f32 %v991, 0.0
      %s996 = scalar_lea.vmem %s11, %s33
      %v997 = vld [vmem:[%s996] sm:$0x1]
      %v999 = vlaneseq
      %v1000 = vshrl.u32 %v999, 7
      %v1001 = vsub.s32 0, %v1000
      %v1002 = vrot.slane %v997, %v1001
      %v1004 = vmul.f32 %v994, %v1002
      %v1005 = vmul.f32 %v995, %v1002
      %s1006 = scalar_lea.vmem %s12, %s33
      %v1007 = vld [vmem:[%s1006] sm:$0x1]
      %v1009 = vlaneseq
      %v1010 = vshrl.u32 %v1009, 7
      %v1011 = vsub.s32 0, %v1010
      %v1012 = vrot.slane %v1007, %v1011
      %v1014 = vadd.f32 %v1004, %v1012
      %v1015 = vadd.f32 %v1005, %v1012
      %p1016 = scmp.lt.s32.totalorder %s33, 1
      // Predicated region
      $region93: #{forward.1} parent=87 // pred_check
        %p1017 = pneg %p1016
      $region94: #{forward.1} parent=87 // pred_check_branch
        %1019 = sbr.rel (%p1017) target = $region96
      $region95: #{forward.1} parent=87 // pred_region
        %1020 = vst [vmem:[#allocation3] sm:$0xff] %v1014
        %1021 = vst [vmem:[#allocation3 + $0x8] sm:$0xff] %v1015
        %v1022 = vld [vmem:[#allocation3] sm:$0xf]
        %1023 = vst [vmem:[%s730 + $0x8] sm:$0xf] %v1022
        %v1024 = vld [vmem:[#allocation3 + $0x4] sm:$0xf]
        %1025 = vst [vmem:[%s779 + $0x8] sm:$0xf] %v1024
        %v1026 = vld [vmem:[#allocation3 + $0x8] sm:$0xf]
        %s1027 = scalar_lea.vmem [#allocation2], 48
        %1028 = vst [vmem:[%s1027 + $0x8] sm:$0xf] %v1026
        %v1029 = vld [vmem:[#allocation3 + $0xc] sm:$0xf]
        %s1030 = scalar_lea.vmem [#allocation2], 64
        %1031 = vst [vmem:[%s1030 + $0x8] sm:$0xf] %v1029
      $region96: #{forward.1} parent=87 // pred_fallthru
        _
      %p1032 = scmp.eq.s32.totalorder %s33, 1
      // Predicated region
      $region97: #{forward.1} parent=87 // pred_check
        %p1033 = pneg %p1032
      $region98: #{forward.1} parent=87 // pred_check_branch
        %1035 = sbr.rel (%p1033) target = $region100
      $region99: #{forward.1} parent=87 // pred_region
        %v1036 = vpack.c.bf16 %v1015, %v1014
        %v1037 = vld [vmem:[%s13] sm:$0xf]
        %v1038 = vld [vmem:[%s13 + $0x4] sm:$0xf]
        %v1039 = vld [vmem:[%s13 + $0x8] sm:$0xf]
        %v1040 = vld [vmem:[%s13 + $0xc] sm:$0xf]
        %v1041 = vld [vmem:[%s13 + $0x10] sm:$0xf]
        %v1042 = vld [vmem:[%s13 + $0x14] sm:$0xf]
        %v1043 = vld [vmem:[%s13 + $0x18] sm:$0xf]
        %v1044 = vld [vmem:[%s13 + $0x1c] sm:$0xf]
        %v1045 = vld [vmem:[%s13 + $0x20] sm:$0xf]
        %v1046 = vld [vmem:[%s13 + $0x24] sm:$0xf]
        %v1047 = vld [vmem:[%s13 + $0x28] sm:$0xf]
        %v1048 = vld [vmem:[%s13 + $0x2c] sm:$0xf]
        %v1049 = vld [vmem:[%s13 + $0x30] sm:$0xf]
        %v1050 = vld [vmem:[%s13 + $0x34] sm:$0xf]
        %v1051 = vld [vmem:[%s13 + $0x38] sm:$0xf]
        %v1052 = vld [vmem:[%s13 + $0x3c] sm:$0xf]
        %v1053 = vld [vmem:[%s14] sm:$0x1]
        %v1055 = vlaneseq
        %v1056 = vshrl.u32 %v1055, 7
        %v1057 = vsub.s32 0, %v1056
        %v1058 = vrot.slane %v1053, %v1057
        %v1076 = vunpack.c.l.b16 %v1037
        %v1077 = vunpack.c.l.b16 %v1038
        %v1078 = vunpack.c.l.b16 %v1039
        %v1079 = vunpack.c.l.b16 %v1040
        %v1080 = vunpack.c.l.b16 %v1041
        %v1081 = vunpack.c.l.b16 %v1042
        %v1082 = vunpack.c.l.b16 %v1043
        %v1083 = vunpack.c.l.b16 %v1044
        %v1084 = vunpack.c.l.b16 %v1045
        %v1085 = vunpack.c.l.b16 %v1046
        %v1086 = vunpack.c.l.b16 %v1047
        %v1087 = vunpack.c.l.b16 %v1048
        %v1088 = vunpack.c.l.b16 %v1049
        %v1089 = vunpack.c.l.b16 %v1050
        %v1090 = vunpack.c.l.b16 %v1051
        %v1091 = vunpack.c.l.b16 %v1052
        %v1092 = vpack.c.b16 %v1077, %v1076
        %v1093 = vpack.c.b16 %v1079, %v1078
        %v1094 = vpack.c.b16 %v1081, %v1080
        %v1095 = vpack.c.b16 %v1083, %v1082
        %v1096 = vpack.c.b16 %v1085, %v1084
        %v1097 = vpack.c.b16 %v1087, %v1086
        %v1098 = vpack.c.b16 %v1089, %v1088
        %v1099 = vpack.c.b16 %v1091, %v1090
        %1108 = vmatprep.subr.bf16.mxu0 0
        %1109 = vmatpush1.bf16.msra.mxu0 %v1092
        %1110 = vmatprep.subr.bf16.mxu0 0
        %1111 = vmatpush1.bf16.msra.mxu0 %v1093
        %1112 = vmatprep.subr.bf16.mxu0 0
        %1113 = vmatpush1.bf16.msra.mxu0 %v1094
        %1114 = vmatprep.subr.bf16.mxu0 0
        %1115 = vmatpush1.bf16.msra.mxu0 %v1095
        %1116 = vmatprep.subr.bf16.mxu0 0
        %1117 = vmatpush1.bf16.msra.mxu0 %v1096
        %1118 = vmatprep.subr.bf16.mxu0 0
        %1119 = vmatpush1.bf16.msra.mxu0 %v1097
        %1120 = vmatprep.subr.bf16.mxu0 0
        %1121 = vmatpush1.bf16.msra.mxu0 %v1098
        %1122 = vmatprep.subr.bf16.mxu0 0
        %1123 = vmatpush1.bf16.msra.mxu0 %v1099
        %1124 = vmatprep.subr.bf16.mxu0 0
        %1125 = vmatpush1.bf16.msra.mxu0 0
        %1126 = vmatprep.subr.bf16.mxu0 0
        %1127 = vmatpush1.bf16.msra.mxu0 0
        %1128 = vmatprep.subr.bf16.mxu0 0
        %1129 = vmatpush1.bf16.msra.mxu0 0
        %1130 = vmatprep.subr.bf16.mxu0 0
        %1131 = vmatpush1.bf16.msra.mxu0 0
        %1132 = vmatprep.subr.bf16.mxu0 0
        %1133 = vmatpush1.bf16.msra.mxu0 0
        %1134 = vmatprep.subr.bf16.mxu0 0
        %1135 = vmatpush1.bf16.msra.mxu0 0
        %1136 = vmatprep.subr.bf16.mxu0 0
        %1137 = vmatpush1.bf16.msra.mxu0 0
        %1138 = vmatprep.subr.bf16.mxu0 0
        %1139 = vmatpush1.bf16.msra.mxu0 0
        %1140 = vmatprep.mubr.bf16.mxu0 0
        %1141 = vmatmul.mubr.bf16.gmra.mrb[0].mxu0 %v1036
        %v1142 = vpop.f32.mrb[0].mxu0
        %v1143 = vadd.f32 %v1058, %v1142
        %v1144 = vpop.f32.mrb[0].mxu0
        %v1145 = vpop.f32.mrb[0].mxu0
        %v1146 = vadd.f32 %v1058, %v1145
        %v1147 = vpop.f32.mrb[0].mxu0
        %1148 = vdwg.mxu0
        %v1149 = vmax.f32 %v1143, 0.0
        %v1150 = vmax.f32 %v1146, 0.0
        %v1151 = vld [vmem:[%s15] sm:$0x1]
        %v1153 = vlaneseq
        %v1154 = vshrl.u32 %v1153, 7
        %v1155 = vsub.s32 0, %v1154
        %v1156 = vrot.slane %v1151, %v1155
        %v1158 = vmul.f32 %v1149, %v1156
        %v1159 = vmul.f32 %v1150, %v1156
        %v1160 = vld [vmem:[%s16] sm:$0x1]
        %v1162 = vlaneseq
        %v1163 = vshrl.u32 %v1162, 7
        %v1164 = vsub.s32 0, %v1163
        %v1165 = vrot.slane %v1160, %v1164
        %v1167 = vadd.f32 %v1158, %v1165
        %v1168 = vadd.f32 %v1159, %v1165
        %vm1169 = vcmask 261120
        %1170 = vst.msk [vmem:[%s560] sm:$0xff] %vm1169, %v1167
        %1171 = vst.msk [vmem:[%s560 + $0x8] sm:$0xff] %vm1169, %v1168
      $region100: #{forward.1} parent=87 // pred_fallthru
        _
      %p1172 = scmp.lt.s32.totalorder %s32, 1
      %s1173 = scalar_select %p1172, %s32, 1
      %s1174 = smul.addr %s1173, 2
      %s1175 = smul.addr %s1174, 8
      %s1176 = scalar_lea.vmem %s17, %s1175
      // Predicated region
      $region101: #{forward.1} parent=87 // pred_check
        %p1177 = pneg %p420
      $region102: #{forward.1} parent=87 // pred_check_branch
        %1179 = sbr.rel (%p1177) target = $region104
      $region103: #{forward.1} parent=87 // pred_region
        _
      $region104: #{forward.1} parent=87 // pred_fallthru
        _
    $region88: #{forward.1} parent=5 // pred_fallthru
      _
    %p1180 = scmp.le.s32.totalorder 2, %s23
    // Predicated region
    $region105: #{forward.1} parent=5 // pred_check
      %p1181 = pneg %p1180
    $region106: #{forward.1} parent=5 // pred_check_branch
      %1183 = sbr.rel (%p1181) target = $region108
    $region107: #{forward.1} parent=5 // pred_region
      %s1184 = ssub.s32 %s23, 2
      // Predicated region
      $region109: #{forward.1} parent=107 // pred_check
        %p1185 = pneg %p426
      $region110: #{forward.1} parent=107 // pred_check_branch
        %1187 = sbr.rel (%p1185) target = $region112
      $region111: #{forward.1} parent=107 // pred_region
        %p1188 = scmp.lt.s32.totalorder %s34, 1
        %s1189 = scalar_select %p1188, %s34, 1
        %s1190 = smul.addr %s1189, 2
        %s1191 = smul.addr %s1190, 8
        %s1192 = scalar_lea.vmem %s17, %s1191
      $region112: #{forward.1} parent=107 // pred_fallthru
        _
    $region108: #{forward.1} parent=5 // pred_fallthru
      _
  $region6: #{forward.1} parent=0 // loop_footer
    %s27 = sadd.s32 1, %s23
  $region7: #{forward.1} parent=0 // loop_footer_branch
    %22 = sbr.rel target = $region3
  $region8: #{forward.1} parent=0 // loop_exit
    _

</llo_original>
